<compile_context>
chip_gen: v5e
topology: v5e:2x2
jax: 0.10.0
libtpu: 0.0.40
codegen_flags: <defaults>
</compile_context>

<pallas_src>
import jax
import jax.numpy as jnp
from jax import lax
from jax.experimental import pallas as pl
from jax.experimental.pallas import tpu as pltpu

# ---------------- configuration (mirrors EncoderLayer(num_hidden, ffn_hidden)) ----
NUM_HIDDEN = 32     # num_hidden
FFN_HIDDEN = 64     # ffn_hidden
SEQ_LEN    = 45     # forced by attn2 embed_dim=45
HEADS1     = 1      # self.attn heads
HEADS2     = 5      # self.attn2 heads (head_dim = 9)
BATCH      = 2
LN_EPS     = 1e-5


# --------------------------------- kernel -----------------------------------------
def _encoder_layer_kernel(
    x_ref,          # (1, S, H)
    qkv1_ref,       # (H+1, 3H): rows 0..H-1 = fused Wq|Wk|Wv (transposed), row H = bias
    out1_ref,       # (H+1, H) : rows 0..H-1 = Wo^T, row H = bias
    qkv2_ref,       # (S+1, 3S): rows 0..S-1 = fused Wq|Wk|Wv (transposed), row S = bias
    out2_ref,       # (S, S+1) : cols 0..S-1 = Wo (untransposed), col S = bias column
    fc1_ref,        # (H+1, F)
    fc2_ref,        # (F+1, H)
    ln_ref,         # (4, H): ln1_g, ln1_b, ln2_g, ln2_b
    o_ref,          # (1, S, H)
):
    H, S, F = NUM_HIDDEN, SEQ_LEN, FFN_HIDDEN
    x = x_ref[0]                                                  # (S, H)

    # ---------------- attention 1: single head over seq axis, fused QKV ------------
    qkv1 = qkv1_ref[...]
    proj1 = jnp.dot(x, qkv1[:H], preferred_element_type=jnp.float32) + qkv1[H:H + 1]
    q = proj1[:, :H]
    k = proj1[:, H:2 * H]
    v = proj1[:, 2 * H:3 * H]
    # scores = q @ k.T without an explicit transpose (NT dot_general)
    s = lax.dot_general(q, k, (((1,), (1,)), ((), ())),
                        preferred_element_type=jnp.float32) * (1.0 / float(H) ** 0.5)
    s = s - jnp.max(s, axis=-1, keepdims=True)
    p = jnp.exp(s)
    p = p * pl.reciprocal(jnp.sum(p, axis=-1, keepdims=True), approx=True)
    a = jnp.dot(p, v, preferred_element_type=jnp.float32)          # (S, H)
    out1 = out1_ref[...]
    y1 = jnp.dot(a, out1[:H], preferred_element_type=jnp.float32) + out1[H:H + 1]

    # ---------------- attention 2: 5 heads over hidden axis (embed = S = 45) -------
    # z = y1.T is folded into the projection by contracting axis 0 of y1.
    qkv2 = qkv2_ref[...]
    proj2 = lax.dot_general(y1, qkv2[:S], (((0,), (0,)), ((), ())),
                            preferred_element_type=jnp.float32) + qkv2[S:S + 1]   # (H, 3S)
    q2 = proj2[:, :S]
    k2 = proj2[:, S:2 * S]
    v2 = proj2[:, 2 * S:3 * S]
    out2 = out2_ref[...]                                           # (S, S+1)
    hd = S // HEADS2                                               # 9
    scale2 = 1.0 / float(hd) ** 0.5
    y = None                                                       # (S, H) accumulator
    for h in range(HEADS2):                                        # unrolled, static slices
        lo, hi = h * hd, (h + 1) * hd
        qh, kh, vh = q2[:, lo:hi], k2[:, lo:hi], v2[:, lo:hi]
        sh = lax.dot_general(qh, kh, (((1,), (1,)), ((), ())),
                             preferred_element_type=jnp.float32) * scale2
        sh = sh - jnp.max(sh, axis=-1, keepdims=True)
        ph = jnp.exp(sh)
        ph = ph * pl.reciprocal(jnp.sum(ph, axis=-1, keepdims=True), approx=True)
        ah = jnp.dot(ph, vh, preferred_element_type=jnp.float32)   # (H, hd)
        # Fold this head's slice of the output projection straight into the
        # (S, H)-layout result: Wo[:, lo:hi] (S, hd) contracted with ah (H, hd).
        yh = lax.dot_general(out2[:, lo:hi], ah, (((1,), (1,)), ((), ())),
                             preferred_element_type=jnp.float32)   # (S, H)
        y = yh if y is None else y + yh
    y = y + out2[:, S:S + 1]                                       # out_proj bias (per row)

    # ---------------- residual + layernorm 1 ---------------------------------------
    ln = ln_ref[...]
    r = x + y
    mu = jnp.mean(r, axis=-1, keepdims=True)
    var = jnp.mean((r - mu) ** 2, axis=-1, keepdims=True)
    xn = (r - mu) * lax.rsqrt(var + LN_EPS) * ln[0:1] + ln[1:2]

    # ---------------- feed-forward --------------------------------------------------
    fc1 = fc1_ref[...]
    hid = jnp.dot(xn, fc1[:H], preferred_element_type=jnp.float32) + fc1[H:H + 1]
    hid = jnp.maximum(hid, 0.0)
    fc2 = fc2_ref[...]
    ff = jnp.dot(hid, fc2[:F], preferred_element_type=jnp.float32) + fc2[F:F + 1]

    # ---------------- residual + layernorm 2 ---------------------------------------
    r2 = xn + ff
    mu2 = jnp.mean(r2, axis=-1, keepdims=True)
    var2 = jnp.mean((r2 - mu2) ** 2, axis=-1, keepdims=True)
    o_ref[0] = (r2 - mu2) * lax.rsqrt(var2 + LN_EPS) * ln[2:3] + ln[3:4]


# --------------------------------- wrapper -----------------------------------------
def encoder_layer(x, params):
    """x: (B, S, H) float32.  Returns (B, S, H) float32."""
    B, S, H = x.shape

    def row(b):
        return b.reshape(1, -1)

    # Pack parameters into 7 slabs (matrix rows + bias row / bias column).
    qkv1 = jnp.concatenate([params["attn1_in_w"].T, row(params["attn1_in_b"])], axis=0)   # (H+1, 3H)
    out1 = jnp.concatenate([params["attn1_out_w"].T, row(params["attn1_out_b"])], axis=0) # (H+1, H)
    qkv2 = jnp.concatenate([params["attn2_in_w"].T, row(params["attn2_in_b"])], axis=0)   # (S+1, 3S)
    out2 = jnp.concatenate([params["attn2_out_w"],
                            params["attn2_out_b"].reshape(-1, 1)], axis=1)                # (S, S+1)
    fc1 = jnp.concatenate([params["fc1_w"].T, row(params["fc1_b"])], axis=0)              # (H+1, F)
    fc2 = jnp.concatenate([params["fc2_w"].T, row(params["fc2_b"])], axis=0)              # (F+1, H)
    ln = jnp.stack([params["ln1_g"], params["ln1_b"],
                    params["ln2_g"], params["ln2_b"]], axis=0)                            # (4, H)

    slabs = [qkv1, out1, qkv2, out2, fc1, fc2, ln]
    w_specs = [pl.BlockSpec(w.shape, lambda b: (0, 0)) for w in slabs]

    return pl.pallas_call(
        _encoder_layer_kernel,
        out_shape=jax.ShapeDtypeStruct((B, S, H), jnp.float32),
        grid=(B,),
        in_specs=[pl.BlockSpec((1, S, H), lambda b: (b, 0, 0))] + w_specs,
        out_specs=pl.BlockSpec((1, S, H), lambda b: (b, 0, 0)),
        compiler_params=pltpu.CompilerParams(dimension_semantics=("parallel",)),
    )(x, *slabs)


# ------------------------------ parameter init -------------------------------------
def init_params(key, num_hidden=NUM_HIDDEN, ffn_hidden=FFN_HIDDEN, seq=SEQ_LEN):
    ks = jax.random.split(key, 16)

    def mat(k, shape, scale=0.05):
        return jax.random.normal(k, shape, jnp.float32) * scale

    H, F, S = num_hidden, ffn_hidden, seq
    return {
        # attn (embed=H, 1 head): in_proj (3H, H), out_proj (H, H)
        "attn1_in_w":  mat(ks[0], (3 * H, H)),
        "attn1_in_b":  mat(ks[1], (3 * H,), 0.02),
        "attn1_out_w": mat(ks[2], (H, H)),
        "attn1_out_b": mat(ks[3], (H,), 0.02),
        # attn2 (embed=S=45, 5 heads): in_proj (3S, S), out_proj (S, S)
        "attn2_in_w":  mat(ks[4], (3 * S, S)),
        "attn2_in_b":  mat(ks[5], (3 * S,), 0.02),
        "attn2_out_w": mat(ks[6], (S, S)),
        "attn2_out_b": mat(ks[7], (S,), 0.02),
        # layernorm 1
        "ln1_g": 1.0 + 0.1 * mat(ks[8], (H,), 1.0),
        "ln1_b": 0.1 * mat(ks[9], (H,), 1.0),
        # ffn
        "fc1_w": mat(ks[10], (F, H)),
        "fc1_b": mat(ks[11], (F,), 0.02),
        "fc2_w": mat(ks[12], (H, F)),
        "fc2_b": mat(ks[13], (H,), 0.02),
        # layernorm 2
        "ln2_g": 1.0 + 0.1 * mat(ks[14], (H,), 1.0),
        "ln2_b": 0.1 * mat(ks[15], (H,), 1.0),
    }


# ------------------------------ pure-JAX reference ----------------------------------
def ref_encoder_layer(x, p):
    def mha(z, in_w, in_b, out_w, out_b, nheads):
        L, E = z.shape
        qw, kw, vw = jnp.split(in_w, 3, axis=0)
        qb, kb, vb = jnp.split(in_b, 3, axis=0)
        q = z @ qw.T + qb
        k = z @ kw.T + kb
        v = z @ vw.T + vb
        hd = E // nheads
        outs = []
        for h in range(nheads):
            qh, kh, vh = (q[:, h * hd:(h + 1) * hd],
                          k[:, h * hd:(h + 1) * hd],
                          v[:, h * hd:(h + 1) * hd])
            sc = (qh @ kh.T) / (float(hd) ** 0.5)
            outs.append(jax.nn.softmax(sc, axis=-1) @ vh)
        return jnp.concatenate(outs, axis=-1) @ out_w.T + out_b

    def ln(z, g, b):
        mu = z.mean(-1, keepdims=True)
        var = ((z - mu) ** 2).mean(-1, keepdims=True)
        return (z - mu) / jnp.sqrt(var + LN_EPS) * g + b

    def per_batch(xb):
        y1 = mha(xb, p["attn1_in_w"], p["attn1_in_b"],
                 p["attn1_out_w"], p["attn1_out_b"], HEADS1)
        y2 = mha(y1.T, p["attn2_in_w"], p["attn2_in_b"],
                 p["attn2_out_w"], p["attn2_out_b"], HEADS2).T
        xn = ln(xb + y2, p["ln1_g"], p["ln1_b"])
        ff = jnp.maximum(xn @ p["fc1_w"].T + p["fc1_b"], 0.0) @ p["fc2_w"].T + p["fc2_b"]
        return ln(xn + ff, p["ln2_g"], p["ln2_b"])

    return jax.vmap(per_batch)(x)


# ----------------------------------- main -------------------------------------------
if __name__ == "__main__":
    key = jax.random.PRNGKey(0)
    kx, kp = jax.random.split(key)

    x = jax.random.normal(kx, (BATCH, SEQ_LEN, NUM_HIDDEN), jnp.float32)
    params = init_params(kp)

    out = encoder_layer(x, params)
    out = jax.block_until_ready(out)

    ref = ref_encoder_layer(x, params)
    assert out.shape == (BATCH, SEQ_LEN, NUM_HIDDEN)
    # tolerance loosened slightly vs exact-divide softmax because the kernel uses
    # the approximate EUP reciprocal for the softmax normalization.
    assert jnp.allclose(out, ref, rtol=2e-3, atol=2e-3), (
        f"max abs diff {jnp.max(jnp.abs(out - ref))}")

    print("KERNEL_OK")
</pallas_src>

<mosaic_0001>
module attributes {stable_mosaic.version = 11 : i64} {
  func.func @_encoder_layer_kernel(%arg0: i32, %arg1: memref<1x45x32xf32, #tpu.memory_space<vmem>>, %arg2: memref<33x96xf32, #tpu.memory_space<vmem>>, %arg3: memref<33x32xf32, #tpu.memory_space<vmem>>, %arg4: memref<46x135xf32, #tpu.memory_space<vmem>>, %arg5: memref<45x46xf32, #tpu.memory_space<vmem>>, %arg6: memref<33x64xf32, #tpu.memory_space<vmem>>, %arg7: memref<65x32xf32, #tpu.memory_space<vmem>>, %arg8: memref<4x32xf32, #tpu.memory_space<vmem>>, %arg9: memref<1x45x32xf32, #tpu.memory_space<vmem>>) attributes {dimension_semantics = [#tpu.dimension_semantics<parallel>], iteration_bounds = array<i64: 2>, scalar_prefetch = 0 : i64, scratch_operands = 0 : i64, tpu.core_type = #tpu.core_type<tc>, window_params = [{transform_indices = @transform_0, window_bounds = array<i64: 1, 45, 32>}, {pipeline_mode = #tpu.pipeline_mode<synchronous>, transform_indices = @transform_1, window_bounds = array<i64: 33, 96>}, {pipeline_mode = #tpu.pipeline_mode<synchronous>, transform_indices = @transform_2, window_bounds = array<i64: 33, 32>}, {pipeline_mode = #tpu.pipeline_mode<synchronous>, transform_indices = @transform_3, window_bounds = array<i64: 46, 135>}, {pipeline_mode = #tpu.pipeline_mode<synchronous>, transform_indices = @transform_4, window_bounds = array<i64: 45, 46>}, {pipeline_mode = #tpu.pipeline_mode<synchronous>, transform_indices = @transform_5, window_bounds = array<i64: 33, 64>}, {pipeline_mode = #tpu.pipeline_mode<synchronous>, transform_indices = @transform_6, window_bounds = array<i64: 65, 32>}, {pipeline_mode = #tpu.pipeline_mode<synchronous>, transform_indices = @transform_7, window_bounds = array<i64: 4, 32>}, {transform_indices = @transform_8, window_bounds = array<i64: 1, 45, 32>}]} {
    %c0 = arith.constant 0 : index
    %c0_0 = arith.constant 0 : index
    %c0_1 = arith.constant 0 : index
    %0 = vector.load %arg1[%c0, %c0_0, %c0_1] : memref<1x45x32xf32, #tpu.memory_space<vmem>>, vector<1x45x32xf32>
    %1 = vector.shape_cast %0 : vector<1x45x32xf32> to vector<45x32xf32>
    %c0_2 = arith.constant 0 : index
    %c0_3 = arith.constant 0 : index
    %2 = vector.load %arg2[%c0_2, %c0_3] : memref<33x96xf32, #tpu.memory_space<vmem>>, vector<33x96xf32>
    %3 = vector.extract_strided_slice %2 {offsets = [0, 0], sizes = [32, 96], strides = [1, 1]} : vector<33x96xf32> to vector<32x96xf32>
    %cst = arith.constant dense<0.000000e+00> : vector<45x96xf32>
    %4 = tpu.matmul %1, %3, %cst {dimension_numbers = #tpu.dot_dimension_numbers<[1], [0], [0], [1], [0, 0, 1, 1], [], []>} : vector<45x32xf32>, vector<32x96xf32>, vector<45x96xf32> -> vector<45x96xf32>
    %5 = vector.extract_strided_slice %2 {offsets = [32, 0], sizes = [1, 96], strides = [1, 1]} : vector<33x96xf32> to vector<1x96xf32>
    %6 = vector.broadcast %5 : vector<1x96xf32> to vector<45x96xf32>
    %7 = arith.addf %4, %6 : vector<45x96xf32>
    %8 = vector.extract_strided_slice %7 {offsets = [0, 0], sizes = [45, 32], strides = [1, 1]} : vector<45x96xf32> to vector<45x32xf32>
    %9 = vector.extract_strided_slice %7 {offsets = [0, 32], sizes = [45, 32], strides = [1, 1]} : vector<45x96xf32> to vector<45x32xf32>
    %10 = vector.extract_strided_slice %7 {offsets = [0, 64], sizes = [45, 32], strides = [1, 1]} : vector<45x96xf32> to vector<45x32xf32>
    %cst_4 = arith.constant dense<0.000000e+00> : vector<45x45xf32>
    %11 = tpu.matmul %8, %9, %cst_4 {dimension_numbers = #tpu.dot_dimension_numbers<[1], [1], [0], [0], [0, 0, 1, 0], [], []>} : vector<45x32xf32>, vector<45x32xf32>, vector<45x45xf32> -> vector<45x45xf32>
    %cst_5 = arith.constant 0.176776692 : f32
    %12 = vector.broadcast %cst_5 : f32 to vector<45x45xf32>
    %13 = arith.mulf %11, %12 : vector<45x45xf32>
    %cst_6 = arith.constant dense<0xFF800000> : vector<45xf32>
    %14 = vector.multi_reduction <maximumf>, %13, %cst_6 [1] : vector<45x45xf32> to vector<45xf32>
    %15 = vector.shape_cast %14 : vector<45xf32> to vector<45x1xf32>
    %16 = vector.broadcast %15 : vector<45x1xf32> to vector<45x45xf32>
    %17 = arith.subf %13, %16 : vector<45x45xf32>
    %18 = math.exp %17 : vector<45x45xf32>
    %cst_7 = arith.constant dense<0.000000e+00> : vector<45xf32>
    %19 = vector.multi_reduction <add>, %18, %cst_7 [1] : vector<45x45xf32> to vector<45xf32>
    %20 = vector.shape_cast %19 : vector<45xf32> to vector<45x1xf32>
    %21 = tpu.reciprocal %20 {approx = true} : vector<45x1xf32> -> vector<45x1xf32>
    %22 = vector.broadcast %21 : vector<45x1xf32> to vector<45x45xf32>
    %23 = arith.mulf %18, %22 : vector<45x45xf32>
    %cst_8 = arith.constant dense<0.000000e+00> : vector<45x32xf32>
    %24 = tpu.matmul %23, %10, %cst_8 {dimension_numbers = #tpu.dot_dimension_numbers<[1], [0], [0], [1], [0, 0, 1, 1], [], []>} : vector<45x45xf32>, vector<45x32xf32>, vector<45x32xf32> -> vector<45x32xf32>
    %c0_9 = arith.constant 0 : index
    %c0_10 = arith.constant 0 : index
    %25 = vector.load %arg3[%c0_9, %c0_10] : memref<33x32xf32, #tpu.memory_space<vmem>>, vector<33x32xf32>
    %26 = vector.extract_strided_slice %25 {offsets = [0, 0], sizes = [32, 32], strides = [1, 1]} : vector<33x32xf32> to vector<32x32xf32>
    %cst_11 = arith.constant dense<0.000000e+00> : vector<45x32xf32>
    %27 = tpu.matmul %24, %26, %cst_11 {dimension_numbers = #tpu.dot_dimension_numbers<[1], [0], [0], [1], [0, 0, 1, 1], [], []>} : vector<45x32xf32>, vector<32x32xf32>, vector<45x32xf32> -> vector<45x32xf32>
    %28 = vector.extract_strided_slice %25 {offsets = [32, 0], sizes = [1, 32], strides = [1, 1]} : vector<33x32xf32> to vector<1x32xf32>
    %29 = vector.broadcast %28 : vector<1x32xf32> to vector<45x32xf32>
    %30 = arith.addf %27, %29 : vector<45x32xf32>
    %c0_12 = arith.constant 0 : index
    %c0_13 = arith.constant 0 : index
    %31 = vector.load %arg4[%c0_12, %c0_13] : memref<46x135xf32, #tpu.memory_space<vmem>>, vector<46x135xf32>
    %32 = vector.extract_strided_slice %31 {offsets = [0, 0], sizes = [45, 135], strides = [1, 1]} : vector<46x135xf32> to vector<45x135xf32>
    %cst_14 = arith.constant dense<0.000000e+00> : vector<32x135xf32>
    %33 = tpu.matmul %30, %32, %cst_14 {dimension_numbers = #tpu.dot_dimension_numbers<[0], [0], [1], [1], [0, 1, 1, 1], [], []>} : vector<45x32xf32>, vector<45x135xf32>, vector<32x135xf32> -> vector<32x135xf32>
    %34 = vector.extract_strided_slice %31 {offsets = [45, 0], sizes = [1, 135], strides = [1, 1]} : vector<46x135xf32> to vector<1x135xf32>
    %35 = vector.broadcast %34 : vector<1x135xf32> to vector<32x135xf32>
    %36 = arith.addf %33, %35 : vector<32x135xf32>
    %37 = vector.extract_strided_slice %36 {offsets = [0, 0], sizes = [32, 45], strides = [1, 1]} : vector<32x135xf32> to vector<32x45xf32>
    %38 = vector.extract_strided_slice %36 {offsets = [0, 45], sizes = [32, 45], strides = [1, 1]} : vector<32x135xf32> to vector<32x45xf32>
    %39 = vector.extract_strided_slice %36 {offsets = [0, 90], sizes = [32, 45], strides = [1, 1]} : vector<32x135xf32> to vector<32x45xf32>
    %c0_15 = arith.constant 0 : index
    %c0_16 = arith.constant 0 : index
    %40 = vector.load %arg5[%c0_15, %c0_16] : memref<45x46xf32, #tpu.memory_space<vmem>>, vector<45x46xf32>
    %41 = vector.extract_strided_slice %37 {offsets = [0, 0], sizes = [32, 9], strides = [1, 1]} : vector<32x45xf32> to vector<32x9xf32>
    %42 = vector.extract_strided_slice %38 {offsets = [0, 0], sizes = [32, 9], strides = [1, 1]} : vector<32x45xf32> to vector<32x9xf32>
    %43 = vector.extract_strided_slice %39 {offsets = [0, 0], sizes = [32, 9], strides = [1, 1]} : vector<32x45xf32> to vector<32x9xf32>
    %cst_17 = arith.constant dense<0.000000e+00> : vector<32x32xf32>
    %44 = tpu.matmul %41, %42, %cst_17 {dimension_numbers = #tpu.dot_dimension_numbers<[1], [1], [0], [0], [0, 0, 1, 0], [], []>} : vector<32x9xf32>, vector<32x9xf32>, vector<32x32xf32> -> vector<32x32xf32>
    %cst_18 = arith.constant 0.333333343 : f32
    %45 = vector.broadcast %cst_18 : f32 to vector<32x32xf32>
    %46 = arith.mulf %44, %45 : vector<32x32xf32>
    %cst_19 = arith.constant dense<0xFF800000> : vector<32xf32>
    %47 = vector.multi_reduction <maximumf>, %46, %cst_19 [1] : vector<32x32xf32> to vector<32xf32>
    %48 = vector.shape_cast %47 : vector<32xf32> to vector<32x1xf32>
    %49 = vector.broadcast %48 : vector<32x1xf32> to vector<32x32xf32>
    %50 = arith.subf %46, %49 : vector<32x32xf32>
    %51 = math.exp %50 : vector<32x32xf32>
    %cst_20 = arith.constant dense<0.000000e+00> : vector<32xf32>
    %52 = vector.multi_reduction <add>, %51, %cst_20 [1] : vector<32x32xf32> to vector<32xf32>
    %53 = vector.shape_cast %52 : vector<32xf32> to vector<32x1xf32>
    %54 = tpu.reciprocal %53 {approx = true} : vector<32x1xf32> -> vector<32x1xf32>
    %55 = vector.broadcast %54 : vector<32x1xf32> to vector<32x32xf32>
    %56 = arith.mulf %51, %55 : vector<32x32xf32>
    %cst_21 = arith.constant dense<0.000000e+00> : vector<32x9xf32>
    %57 = tpu.matmul %56, %43, %cst_21 {dimension_numbers = #tpu.dot_dimension_numbers<[1], [0], [0], [1], [0, 0, 1, 1], [], []>} : vector<32x32xf32>, vector<32x9xf32>, vector<32x9xf32> -> vector<32x9xf32>
    %58 = vector.extract_strided_slice %40 {offsets = [0, 0], sizes = [45, 9], strides = [1, 1]} : vector<45x46xf32> to vector<45x9xf32>
    %cst_22 = arith.constant dense<0.000000e+00> : vector<45x32xf32>
    %59 = tpu.matmul %58, %57, %cst_22 {dimension_numbers = #tpu.dot_dimension_numbers<[1], [1], [0], [0], [0, 0, 1, 0], [], []>} : vector<45x9xf32>, vector<32x9xf32>, vector<45x32xf32> -> vector<45x32xf32>
    %60 = vector.extract_strided_slice %37 {offsets = [0, 9], sizes = [32, 9], strides = [1, 1]} : vector<32x45xf32> to vector<32x9xf32>
    %61 = vector.extract_strided_slice %38 {offsets = [0, 9], sizes = [32, 9], strides = [1, 1]} : vector<32x45xf32> to vector<32x9xf32>
    %62 = vector.extract_strided_slice %39 {offsets = [0, 9], sizes = [32, 9], strides = [1, 1]} : vector<32x45xf32> to vector<32x9xf32>
    %cst_23 = arith.constant dense<0.000000e+00> : vector<32x32xf32>
    %63 = tpu.matmul %60, %61, %cst_23 {dimension_numbers = #tpu.dot_dimension_numbers<[1], [1], [0], [0], [0, 0, 1, 0], [], []>} : vector<32x9xf32>, vector<32x9xf32>, vector<32x32xf32> -> vector<32x32xf32>
    %cst_24 = arith.constant 0.333333343 : f32
    %64 = vector.broadcast %cst_24 : f32 to vector<32x32xf32>
    %65 = arith.mulf %63, %64 : vector<32x32xf32>
    %cst_25 = arith.constant dense<0xFF800000> : vector<32xf32>
    %66 = vector.multi_reduction <maximumf>, %65, %cst_25 [1] : vector<32x32xf32> to vector<32xf32>
    %67 = vector.shape_cast %66 : vector<32xf32> to vector<32x1xf32>
    %68 = vector.broadcast %67 : vector<32x1xf32> to vector<32x32xf32>
    %69 = arith.subf %65, %68 : vector<32x32xf32>
    %70 = math.exp %69 : vector<32x32xf32>
    %cst_26 = arith.constant dense<0.000000e+00> : vector<32xf32>
    %71 = vector.multi_reduction <add>, %70, %cst_26 [1] : vector<32x32xf32> to vector<32xf32>
    %72 = vector.shape_cast %71 : vector<32xf32> to vector<32x1xf32>
    %73 = tpu.reciprocal %72 {approx = true} : vector<32x1xf32> -> vector<32x1xf32>
    %74 = vector.broadcast %73 : vector<32x1xf32> to vector<32x32xf32>
    %75 = arith.mulf %70, %74 : vector<32x32xf32>
    %cst_27 = arith.constant dense<0.000000e+00> : vector<32x9xf32>
    %76 = tpu.matmul %75, %62, %cst_27 {dimension_numbers = #tpu.dot_dimension_numbers<[1], [0], [0], [1], [0, 0, 1, 1], [], []>} : vector<32x32xf32>, vector<32x9xf32>, vector<32x9xf32> -> vector<32x9xf32>
    %77 = vector.extract_strided_slice %40 {offsets = [0, 9], sizes = [45, 9], strides = [1, 1]} : vector<45x46xf32> to vector<45x9xf32>
    %cst_28 = arith.constant dense<0.000000e+00> : vector<45x32xf32>
    %78 = tpu.matmul %77, %76, %cst_28 {dimension_numbers = #tpu.dot_dimension_numbers<[1], [1], [0], [0], [0, 0, 1, 0], [], []>} : vector<45x9xf32>, vector<32x9xf32>, vector<45x32xf32> -> vector<45x32xf32>
    %79 = arith.addf %59, %78 : vector<45x32xf32>
    %80 = vector.extract_strided_slice %37 {offsets = [0, 18], sizes = [32, 9], strides = [1, 1]} : vector<32x45xf32> to vector<32x9xf32>
    %81 = vector.extract_strided_slice %38 {offsets = [0, 18], sizes = [32, 9], strides = [1, 1]} : vector<32x45xf32> to vector<32x9xf32>
    %82 = vector.extract_strided_slice %39 {offsets = [0, 18], sizes = [32, 9], strides = [1, 1]} : vector<32x45xf32> to vector<32x9xf32>
    %cst_29 = arith.constant dense<0.000000e+00> : vector<32x32xf32>
    %83 = tpu.matmul %80, %81, %cst_29 {dimension_numbers = #tpu.dot_dimension_numbers<[1], [1], [0], [0], [0, 0, 1, 0], [], []>} : vector<32x9xf32>, vector<32x9xf32>, vector<32x32xf32> -> vector<32x32xf32>
    %cst_30 = arith.constant 0.333333343 : f32
    %84 = vector.broadcast %cst_30 : f32 to vector<32x32xf32>
    %85 = arith.mulf %83, %84 : vector<32x32xf32>
    %cst_31 = arith.constant dense<0xFF800000> : vector<32xf32>
    %86 = vector.multi_reduction <maximumf>, %85, %cst_31 [1] : vector<32x32xf32> to vector<32xf32>
    %87 = vector.shape_cast %86 : vector<32xf32> to vector<32x1xf32>
    %88 = vector.broadcast %87 : vector<32x1xf32> to vector<32x32xf32>
    %89 = arith.subf %85, %88 : vector<32x32xf32>
    %90 = math.exp %89 : vector<32x32xf32>
    %cst_32 = arith.constant dense<0.000000e+00> : vector<32xf32>
    %91 = vector.multi_reduction <add>, %90, %cst_32 [1] : vector<32x32xf32> to vector<32xf32>
    %92 = vector.shape_cast %91 : vector<32xf32> to vector<32x1xf32>
    %93 = tpu.reciprocal %92 {approx = true} : vector<32x1xf32> -> vector<32x1xf32>
    %94 = vector.broadcast %93 : vector<32x1xf32> to vector<32x32xf32>
    %95 = arith.mulf %90, %94 : vector<32x32xf32>
    %cst_33 = arith.constant dense<0.000000e+00> : vector<32x9xf32>
    %96 = tpu.matmul %95, %82, %cst_33 {dimension_numbers = #tpu.dot_dimension_numbers<[1], [0], [0], [1], [0, 0, 1, 1], [], []>} : vector<32x32xf32>, vector<32x9xf32>, vector<32x9xf32> -> vector<32x9xf32>
    %97 = vector.extract_strided_slice %40 {offsets = [0, 18], sizes = [45, 9], strides = [1, 1]} : vector<45x46xf32> to vector<45x9xf32>
    %cst_34 = arith.constant dense<0.000000e+00> : vector<45x32xf32>
    %98 = tpu.matmul %97, %96, %cst_34 {dimension_numbers = #tpu.dot_dimension_numbers<[1], [1], [0], [0], [0, 0, 1, 0], [], []>} : vector<45x9xf32>, vector<32x9xf32>, vector<45x32xf32> -> vector<45x32xf32>
    %99 = arith.addf %79, %98 : vector<45x32xf32>
    %100 = vector.extract_strided_slice %37 {offsets = [0, 27], sizes = [32, 9], strides = [1, 1]} : vector<32x45xf32> to vector<32x9xf32>
    %101 = vector.extract_strided_slice %38 {offsets = [0, 27], sizes = [32, 9], strides = [1, 1]} : vector<32x45xf32> to vector<32x9xf32>
    %102 = vector.extract_strided_slice %39 {offsets = [0, 27], sizes = [32, 9], strides = [1, 1]} : vector<32x45xf32> to vector<32x9xf32>
    %cst_35 = arith.constant dense<0.000000e+00> : vector<32x32xf32>
    %103 = tpu.matmul %100, %101, %cst_35 {dimension_numbers = #tpu.dot_dimension_numbers<[1], [1], [0], [0], [0, 0, 1, 0], [], []>} : vector<32x9xf32>, vector<32x9xf32>, vector<32x32xf32> -> vector<32x32xf32>
    %cst_36 = arith.constant 0.333333343 : f32
    %104 = vector.broadcast %cst_36 : f32 to vector<32x32xf32>
    %105 = arith.mulf %103, %104 : vector<32x32xf32>
    %cst_37 = arith.constant dense<0xFF800000> : vector<32xf32>
    %106 = vector.multi_reduction <maximumf>, %105, %cst_37 [1] : vector<32x32xf32> to vector<32xf32>
    %107 = vector.shape_cast %106 : vector<32xf32> to vector<32x1xf32>
    %108 = vector.broadcast %107 : vector<32x1xf32> to vector<32x32xf32>
    %109 = arith.subf %105, %108 : vector<32x32xf32>
    %110 = math.exp %109 : vector<32x32xf32>
    %cst_38 = arith.constant dense<0.000000e+00> : vector<32xf32>
    %111 = vector.multi_reduction <add>, %110, %cst_38 [1] : vector<32x32xf32> to vector<32xf32>
    %112 = vector.shape_cast %111 : vector<32xf32> to vector<32x1xf32>
    %113 = tpu.reciprocal %112 {approx = true} : vector<32x1xf32> -> vector<32x1xf32>
    %114 = vector.broadcast %113 : vector<32x1xf32> to vector<32x32xf32>
    %115 = arith.mulf %110, %114 : vector<32x32xf32>
    %cst_39 = arith.constant dense<0.000000e+00> : vector<32x9xf32>
    %116 = tpu.matmul %115, %102, %cst_39 {dimension_numbers = #tpu.dot_dimension_numbers<[1], [0], [0], [1], [0, 0, 1, 1], [], []>} : vector<32x32xf32>, vector<32x9xf32>, vector<32x9xf32> -> vector<32x9xf32>
    %117 = vector.extract_strided_slice %40 {offsets = [0, 27], sizes = [45, 9], strides = [1, 1]} : vector<45x46xf32> to vector<45x9xf32>
    %cst_40 = arith.constant dense<0.000000e+00> : vector<45x32xf32>
    %118 = tpu.matmul %117, %116, %cst_40 {dimension_numbers = #tpu.dot_dimension_numbers<[1], [1], [0], [0], [0, 0, 1, 0], [], []>} : vector<45x9xf32>, vector<32x9xf32>, vector<45x32xf32> -> vector<45x32xf32>
    %119 = arith.addf %99, %118 : vector<45x32xf32>
    %120 = vector.extract_strided_slice %37 {offsets = [0, 36], sizes = [32, 9], strides = [1, 1]} : vector<32x45xf32> to vector<32x9xf32>
    %121 = vector.extract_strided_slice %38 {offsets = [0, 36], sizes = [32, 9], strides = [1, 1]} : vector<32x45xf32> to vector<32x9xf32>
    %122 = vector.extract_strided_slice %39 {offsets = [0, 36], sizes = [32, 9], strides = [1, 1]} : vector<32x45xf32> to vector<32x9xf32>
    %cst_41 = arith.constant dense<0.000000e+00> : vector<32x32xf32>
    %123 = tpu.matmul %120, %121, %cst_41 {dimension_numbers = #tpu.dot_dimension_numbers<[1], [1], [0], [0], [0, 0, 1, 0], [], []>} : vector<32x9xf32>, vector<32x9xf32>, vector<32x32xf32> -> vector<32x32xf32>
    %cst_42 = arith.constant 0.333333343 : f32
    %124 = vector.broadcast %cst_42 : f32 to vector<32x32xf32>
    %125 = arith.mulf %123, %124 : vector<32x32xf32>
    %cst_43 = arith.constant dense<0xFF800000> : vector<32xf32>
    %126 = vector.multi_reduction <maximumf>, %125, %cst_43 [1] : vector<32x32xf32> to vector<32xf32>
    %127 = vector.shape_cast %126 : vector<32xf32> to vector<32x1xf32>
    %128 = vector.broadcast %127 : vector<32x1xf32> to vector<32x32xf32>
    %129 = arith.subf %125, %128 : vector<32x32xf32>
    %130 = math.exp %129 : vector<32x32xf32>
    %cst_44 = arith.constant dense<0.000000e+00> : vector<32xf32>
    %131 = vector.multi_reduction <add>, %130, %cst_44 [1] : vector<32x32xf32> to vector<32xf32>
    %132 = vector.shape_cast %131 : vector<32xf32> to vector<32x1xf32>
    %133 = tpu.reciprocal %132 {approx = true} : vector<32x1xf32> -> vector<32x1xf32>
    %134 = vector.broadcast %133 : vector<32x1xf32> to vector<32x32xf32>
    %135 = arith.mulf %130, %134 : vector<32x32xf32>
    %cst_45 = arith.constant dense<0.000000e+00> : vector<32x9xf32>
    %136 = tpu.matmul %135, %122, %cst_45 {dimension_numbers = #tpu.dot_dimension_numbers<[1], [0], [0], [1], [0, 0, 1, 1], [], []>} : vector<32x32xf32>, vector<32x9xf32>, vector<32x9xf32> -> vector<32x9xf32>
    %137 = vector.extract_strided_slice %40 {offsets = [0, 36], sizes = [45, 9], strides = [1, 1]} : vector<45x46xf32> to vector<45x9xf32>
    %cst_46 = arith.constant dense<0.000000e+00> : vector<45x32xf32>
    %138 = tpu.matmul %137, %136, %cst_46 {dimension_numbers = #tpu.dot_dimension_numbers<[1], [1], [0], [0], [0, 0, 1, 0], [], []>} : vector<45x9xf32>, vector<32x9xf32>, vector<45x32xf32> -> vector<45x32xf32>
    %139 = arith.addf %119, %138 : vector<45x32xf32>
    %140 = vector.extract_strided_slice %40 {offsets = [0, 45], sizes = [45, 1], strides = [1, 1]} : vector<45x46xf32> to vector<45x1xf32>
    %141 = vector.broadcast %140 : vector<45x1xf32> to vector<45x32xf32>
    %142 = arith.addf %139, %141 : vector<45x32xf32>
    %c0_47 = arith.constant 0 : index
    %c0_48 = arith.constant 0 : index
    %143 = vector.load %arg8[%c0_47, %c0_48] : memref<4x32xf32, #tpu.memory_space<vmem>>, vector<4x32xf32>
    %144 = arith.addf %1, %142 : vector<45x32xf32>
    %cst_49 = arith.constant dense<0.000000e+00> : vector<45xf32>
    %145 = vector.multi_reduction <add>, %144, %cst_49 [1] : vector<45x32xf32> to vector<45xf32>
    %146 = vector.shape_cast %145 : vector<45xf32> to vector<45x1xf32>
    %cst_50 = arith.constant 3.200000e+01 : f32
    %147 = vector.broadcast %cst_50 : f32 to vector<45x1xf32>
    %148 = arith.divf %146, %147 : vector<45x1xf32>
    %149 = vector.broadcast %148 : vector<45x1xf32> to vector<45x32xf32>
    %150 = arith.subf %144, %149 : vector<45x32xf32>
    %151 = arith.mulf %150, %150 : vector<45x32xf32>
    %cst_51 = arith.constant dense<0.000000e+00> : vector<45xf32>
    %152 = vector.multi_reduction <add>, %151, %cst_51 [1] : vector<45x32xf32> to vector<45xf32>
    %153 = vector.shape_cast %152 : vector<45xf32> to vector<45x1xf32>
    %cst_52 = arith.constant 3.200000e+01 : f32
    %154 = vector.broadcast %cst_52 : f32 to vector<45x1xf32>
    %155 = arith.divf %153, %154 : vector<45x1xf32>
    %156 = vector.broadcast %148 : vector<45x1xf32> to vector<45x32xf32>
    %157 = arith.subf %144, %156 : vector<45x32xf32>
    %cst_53 = arith.constant 9.99999974E-6 : f32
    %158 = vector.broadcast %cst_53 : f32 to vector<45x1xf32>
    %159 = arith.addf %155, %158 : vector<45x1xf32>
    %160 = math.rsqrt %159 : vector<45x1xf32>
    %161 = vector.broadcast %160 : vector<45x1xf32> to vector<45x32xf32>
    %162 = arith.mulf %157, %161 : vector<45x32xf32>
    %163 = vector.extract_strided_slice %143 {offsets = [0, 0], sizes = [1, 32], strides = [1, 1]} : vector<4x32xf32> to vector<1x32xf32>
    %164 = vector.broadcast %163 : vector<1x32xf32> to vector<45x32xf32>
    %165 = arith.mulf %162, %164 : vector<45x32xf32>
    %166 = vector.extract_strided_slice %143 {offsets = [1, 0], sizes = [1, 32], strides = [1, 1]} : vector<4x32xf32> to vector<1x32xf32>
    %167 = vector.broadcast %166 : vector<1x32xf32> to vector<45x32xf32>
    %168 = arith.addf %165, %167 : vector<45x32xf32>
    %c0_54 = arith.constant 0 : index
    %c0_55 = arith.constant 0 : index
    %169 = vector.load %arg6[%c0_54, %c0_55] : memref<33x64xf32, #tpu.memory_space<vmem>>, vector<33x64xf32>
    %170 = vector.extract_strided_slice %169 {offsets = [0, 0], sizes = [32, 64], strides = [1, 1]} : vector<33x64xf32> to vector<32x64xf32>
    %cst_56 = arith.constant dense<0.000000e+00> : vector<45x64xf32>
    %171 = tpu.matmul %168, %170, %cst_56 {dimension_numbers = #tpu.dot_dimension_numbers<[1], [0], [0], [1], [0, 0, 1, 1], [], []>} : vector<45x32xf32>, vector<32x64xf32>, vector<45x64xf32> -> vector<45x64xf32>
    %172 = vector.extract_strided_slice %169 {offsets = [32, 0], sizes = [1, 64], strides = [1, 1]} : vector<33x64xf32> to vector<1x64xf32>
    %173 = vector.broadcast %172 : vector<1x64xf32> to vector<45x64xf32>
    %174 = arith.addf %171, %173 : vector<45x64xf32>
    %cst_57 = arith.constant 0.000000e+00 : f32
    %175 = vector.broadcast %cst_57 : f32 to vector<45x64xf32>
    %176 = arith.maximumf %174, %175 : vector<45x64xf32>
    %c0_58 = arith.constant 0 : index
    %c0_59 = arith.constant 0 : index
    %177 = vector.load %arg7[%c0_58, %c0_59] : memref<65x32xf32, #tpu.memory_space<vmem>>, vector<65x32xf32>
    %178 = vector.extract_strided_slice %177 {offsets = [0, 0], sizes = [64, 32], strides = [1, 1]} : vector<65x32xf32> to vector<64x32xf32>
    %cst_60 = arith.constant dense<0.000000e+00> : vector<45x32xf32>
    %179 = tpu.matmul %176, %178, %cst_60 {dimension_numbers = #tpu.dot_dimension_numbers<[1], [0], [0], [1], [0, 0, 1, 1], [], []>} : vector<45x64xf32>, vector<64x32xf32>, vector<45x32xf32> -> vector<45x32xf32>
    %180 = vector.extract_strided_slice %177 {offsets = [64, 0], sizes = [1, 32], strides = [1, 1]} : vector<65x32xf32> to vector<1x32xf32>
    %181 = vector.broadcast %180 : vector<1x32xf32> to vector<45x32xf32>
    %182 = arith.addf %179, %181 : vector<45x32xf32>
    %183 = arith.addf %168, %182 : vector<45x32xf32>
    %cst_61 = arith.constant dense<0.000000e+00> : vector<45xf32>
    %184 = vector.multi_reduction <add>, %183, %cst_61 [1] : vector<45x32xf32> to vector<45xf32>
    %185 = vector.shape_cast %184 : vector<45xf32> to vector<45x1xf32>
    %cst_62 = arith.constant 3.200000e+01 : f32
    %186 = vector.broadcast %cst_62 : f32 to vector<45x1xf32>
    %187 = arith.divf %185, %186 : vector<45x1xf32>
    %188 = vector.broadcast %187 : vector<45x1xf32> to vector<45x32xf32>
    %189 = arith.subf %183, %188 : vector<45x32xf32>
    %190 = arith.mulf %189, %189 : vector<45x32xf32>
    %cst_63 = arith.constant dense<0.000000e+00> : vector<45xf32>
    %191 = vector.multi_reduction <add>, %190, %cst_63 [1] : vector<45x32xf32> to vector<45xf32>
    %192 = vector.shape_cast %191 : vector<45xf32> to vector<45x1xf32>
    %cst_64 = arith.constant 3.200000e+01 : f32
    %193 = vector.broadcast %cst_64 : f32 to vector<45x1xf32>
    %194 = arith.divf %192, %193 : vector<45x1xf32>
    %195 = vector.broadcast %187 : vector<45x1xf32> to vector<45x32xf32>
    %196 = arith.subf %183, %195 : vector<45x32xf32>
    %cst_65 = arith.constant 9.99999974E-6 : f32
    %197 = vector.broadcast %cst_65 : f32 to vector<45x1xf32>
    %198 = arith.addf %194, %197 : vector<45x1xf32>
    %199 = math.rsqrt %198 : vector<45x1xf32>
    %200 = vector.broadcast %199 : vector<45x1xf32> to vector<45x32xf32>
    %201 = arith.mulf %196, %200 : vector<45x32xf32>
    %202 = vector.extract_strided_slice %143 {offsets = [2, 0], sizes = [1, 32], strides = [1, 1]} : vector<4x32xf32> to vector<1x32xf32>
    %203 = vector.broadcast %202 : vector<1x32xf32> to vector<45x32xf32>
    %204 = arith.mulf %201, %203 : vector<45x32xf32>
    %205 = vector.extract_strided_slice %143 {offsets = [3, 0], sizes = [1, 32], strides = [1, 1]} : vector<4x32xf32> to vector<1x32xf32>
    %206 = vector.broadcast %205 : vector<1x32xf32> to vector<45x32xf32>
    %207 = arith.addf %204, %206 : vector<45x32xf32>
    %c0_66 = arith.constant 0 : index
    %c0_67 = arith.constant 0 : index
    %c0_68 = arith.constant 0 : index
    %208 = vector.load %arg9[%c0_66, %c0_67, %c0_68] : memref<1x45x32xf32, #tpu.memory_space<vmem>>, vector<1x45x32xf32>
    %209 = vector.shape_cast %208 : vector<1x45x32xf32> to vector<45x32xf32>
    %210 = vector.shape_cast %207 : vector<45x32xf32> to vector<1x45x32xf32>
    tpu.vector_store %arg9[%c0_66, %c0_67, %c0_68], %210 {strides = array<i32>} : memref<1x45x32xf32, #tpu.memory_space<vmem>>, vector<1x45x32xf32>,
    return
  }
  func.func @transform_0(%arg0: i32) -> (i32, i32, i32) {
    %c0_i32 = arith.constant 0 : i32
    %c0_i32_0 = arith.constant 0 : i32
    %c0_i32_1 = arith.constant 0 : i32
    return %arg0, %c0_i32, %c0_i32_0 : i32, i32, i32
  }
  func.func @transform_1(%arg0: i32) -> (i32, i32) {
    %c0_i32 = arith.constant 0 : i32
    %c0_i32_0 = arith.constant 0 : i32
    %c0_i32_1 = arith.constant 0 : i32
    return %c0_i32, %c0_i32_0 : i32, i32
  }
  func.func @transform_2(%arg0: i32) -> (i32, i32) {
    %c0_i32 = arith.constant 0 : i32
    %c0_i32_0 = arith.constant 0 : i32
    %c0_i32_1 = arith.constant 0 : i32
    return %c0_i32, %c0_i32_0 : i32, i32
  }
  func.func @transform_3(%arg0: i32) -> (i32, i32) {
    %c0_i32 = arith.constant 0 : i32
    %c0_i32_0 = arith.constant 0 : i32
    %c0_i32_1 = arith.constant 0 : i32
    return %c0_i32, %c0_i32_0 : i32, i32
  }
  func.func @transform_4(%arg0: i32) -> (i32, i32) {
    %c0_i32 = arith.constant 0 : i32
    %c0_i32_0 = arith.constant 0 : i32
    %c0_i32_1 = arith.constant 0 : i32
    return %c0_i32, %c0_i32_0 : i32, i32
  }
  func.func @transform_5(%arg0: i32) -> (i32, i32) {
    %c0_i32 = arith.constant 0 : i32
    %c0_i32_0 = arith.constant 0 : i32
    %c0_i32_1 = arith.constant 0 : i32
    return %c0_i32, %c0_i32_0 : i32, i32
  }
  func.func @transform_6(%arg0: i32) -> (i32, i32) {
    %c0_i32 = arith.constant 0 : i32
    %c0_i32_0 = arith.constant 0 : i32
    %c0_i32_1 = arith.constant 0 : i32
    return %c0_i32, %c0_i32_0 : i32, i32
  }
  func.func @transform_7(%arg0: i32) -> (i32, i32) {
    %c0_i32 = arith.constant 0 : i32
    %c0_i32_0 = arith.constant 0 : i32
    %c0_i32_1 = arith.constant 0 : i32
    return %c0_i32, %c0_i32_0 : i32, i32
  }
  func.func @transform_8(%arg0: i32) -> (i32, i32, i32) {
    %c0_i32 = arith.constant 0 : i32
    %c0_i32_0 = arith.constant 0 : i32
    %c0_i32_1 = arith.constant 0 : i32
    return %arg0, %c0_i32, %c0_i32_0 : i32, i32, i32
  }
}

</mosaic_0001>

<llo_original>
// kernel: tpu_custom_call.1
$region0: #{tpu_custom_call.1}
  #allocation0 [shape = 'u32[]', space=smem, size = 0x4, offset = 0x4, fixed_abs, tag = 'smem constant byte address 0x4 - core index']
  #allocation1 [shape = 'u32[72,128]{1,0:T(1,128)}', space=vmem, size = 0x9000, scoped, tag = 'internal scratch']
  %s0 = inlined_call_operand.vmem [shape: f32[2,45,32], index: 0, kind: input, shape index: {}]
  %s1 = inlined_call_operand.vmem [shape: f32[33,96], index: 1, kind: input, shape index: {}]
  %s2 = inlined_call_operand.vmem [shape: f32[33,32], index: 2, kind: input, shape index: {}]
  %s3 = inlined_call_operand.vmem [shape: f32[46,135], index: 3, kind: input, shape index: {}]
  %s4 = inlined_call_operand.vmem [shape: f32[45,46], index: 4, kind: input, shape index: {}]
  %s5 = inlined_call_operand.vmem [shape: f32[33,64], index: 5, kind: input, shape index: {}]
  %s6 = inlined_call_operand.vmem [shape: f32[65,32], index: 6, kind: input, shape index: {}]
  %s7 = inlined_call_operand.vmem [shape: f32[4,32], index: 7, kind: input, shape index: {}]
  %s8 = inlined_call_operand.vmem [shape: f32[2,45,32], index: 8, kind: output, shape index: {}]
  %s9 = sld [smem:[#allocation0]]
  $region65: #{tpu_custom_call.1} parent=0
    _
  %s11 = ssub.s32 1, %s9
  %s12 = scalar_select 0, %s11, %s9
  loop: start=0, step=1, limit=4
  $region2: #{tpu_custom_call.1} parent=0 // loop_pre_header
    _
  $region3: #{tpu_custom_call.1} parent=0 // loop_header
    %s14 = sphi 0, %s18
    %p15 = scmp.ge.s32.totalorder %s14, 4
    %s24 = sphi 0, %s26
    %s27 = sphi 0, %s24
    %s28 = sphi 0, %s27
    %s44 = sphi 0, %s28
    %s48 = sphi 0, %s48
    %s50 = sphi 0, %s48
    %s51 = sphi 0, %s50
    %s65 = sphi 0, %s51
    %s69 = sphi 0, %s69
    %s71 = sphi 0, %s69
    %s72 = sphi 0, %s71
    %s86 = sphi 0, %s72
    %s90 = sphi 0, %s90
    %s92 = sphi 0, %s90
    %s93 = sphi 0, %s92
    %s107 = sphi 0, %s93
    %s111 = sphi 0, %s111
    %s113 = sphi 0, %s111
    %s114 = sphi 0, %s113
    %s128 = sphi 0, %s114
    %s132 = sphi 0, %s132
    %s134 = sphi 0, %s132
    %s135 = sphi 0, %s134
    %s149 = sphi 0, %s135
    %s153 = sphi 0, %s153
    %s155 = sphi 0, %s153
    %s156 = sphi 0, %s155
    %s170 = sphi 0, %s156
    %s174 = sphi 0, %s174
    %s176 = sphi 0, %s174
    %s177 = sphi 0, %s176
    %s191 = sphi 0, %s177
    %s197 = sphi 0, %s199
    %s200 = sphi 0, %s197
    %s201 = sphi 0, %s200
    %s217 = sphi 0, %s201
  $region4: #{tpu_custom_call.1} parent=0 // loop_header_branch
    %17 = sbr.rel (%p15) target = $region8
  $region5: #{tpu_custom_call.1} parent=0 // loop_body
    %s19 = ssub.s32 %s14, 1
    %s20 = ssub.s32 %s14, 2
    %s21 = sadd.s32 %s14, 1
    %s22 = ssub.s32 %s14, %s21
    %p23 = scmp.eq.s32.totalorder %s22, 0
    %s25 = sadd.s32 %s24, 1
    %s26 = scalar_select %p23, %s24, %s25
    %p29 = pneg %p23
    %p30 = scmp.eq.s32.totalorder %s14, 1
    %p31 = por %p29, %p30
    %p32 = scmp.ne.s32.totalorder %s24, %s27
    %p33 = scmp.eq.s32.totalorder %s14, 0
    %p34 = por %p32, %p33
    %p35 = scmp.ne.s32.totalorder %s24, %s27
    %p36 = scmp.eq.s32.totalorder %s19, 1
    %p37 = por %p35, %p36
    %p38 = scmp.ne.s32.totalorder %s27, %s28
    %p39 = scmp.eq.s32.totalorder %s19, 0
    %p40 = por %p38, %p39
    %p41 = scmp.ne.s32.totalorder %s27, %s28
    %p42 = scmp.eq.s32.totalorder %s20, 1
    %p43 = por %p41, %p42
    %p45 = scmp.ne.s32.totalorder %s28, %s44
    %p46 = scmp.eq.s32.totalorder %s20, 0
    %p47 = por %p45, %p46
    %s49 = sadd.s32 %s48, 1
    %p52 = scmp.eq.s32.totalorder %s14, 1
    %p53 = scmp.ne.s32.totalorder %s48, %s50
    %p54 = scmp.eq.s32.totalorder %s14, 0
    %p55 = por %p53, %p54
    %p56 = scmp.ne.s32.totalorder %s48, %s50
    %p57 = scmp.eq.s32.totalorder %s19, 1
    %p58 = por %p56, %p57
    %p59 = scmp.ne.s32.totalorder %s50, %s51
    %p60 = scmp.eq.s32.totalorder %s19, 0
    %p61 = por %p59, %p60
    %p62 = scmp.ne.s32.totalorder %s50, %s51
    %p63 = scmp.eq.s32.totalorder %s20, 1
    %p64 = por %p62, %p63
    %p66 = scmp.ne.s32.totalorder %s51, %s65
    %p67 = scmp.eq.s32.totalorder %s20, 0
    %p68 = por %p66, %p67
    %s70 = sadd.s32 %s69, 1
    %p73 = scmp.eq.s32.totalorder %s14, 1
    %p74 = scmp.ne.s32.totalorder %s69, %s71
    %p75 = scmp.eq.s32.totalorder %s14, 0
    %p76 = por %p74, %p75
    %p77 = scmp.ne.s32.totalorder %s69, %s71
    %p78 = scmp.eq.s32.totalorder %s19, 1
    %p79 = por %p77, %p78
    %p80 = scmp.ne.s32.totalorder %s71, %s72
    %p81 = scmp.eq.s32.totalorder %s19, 0
    %p82 = por %p80, %p81
    %p83 = scmp.ne.s32.totalorder %s71, %s72
    %p84 = scmp.eq.s32.totalorder %s20, 1
    %p85 = por %p83, %p84
    %p87 = scmp.ne.s32.totalorder %s72, %s86
    %p88 = scmp.eq.s32.totalorder %s20, 0
    %p89 = por %p87, %p88
    %s91 = sadd.s32 %s90, 1
    %p94 = scmp.eq.s32.totalorder %s14, 1
    %p95 = scmp.ne.s32.totalorder %s90, %s92
    %p96 = scmp.eq.s32.totalorder %s14, 0
    %p97 = por %p95, %p96
    %p98 = scmp.ne.s32.totalorder %s90, %s92
    %p99 = scmp.eq.s32.totalorder %s19, 1
    %p100 = por %p98, %p99
    %p101 = scmp.ne.s32.totalorder %s92, %s93
    %p102 = scmp.eq.s32.totalorder %s19, 0
    %p103 = por %p101, %p102
    %p104 = scmp.ne.s32.totalorder %s92, %s93
    %p105 = scmp.eq.s32.totalorder %s20, 1
    %p106 = por %p104, %p105
    %p108 = scmp.ne.s32.totalorder %s93, %s107
    %p109 = scmp.eq.s32.totalorder %s20, 0
    %p110 = por %p108, %p109
    %s112 = sadd.s32 %s111, 1
    %p115 = scmp.eq.s32.totalorder %s14, 1
    %p116 = scmp.ne.s32.totalorder %s111, %s113
    %p117 = scmp.eq.s32.totalorder %s14, 0
    %p118 = por %p116, %p117
    %p119 = scmp.ne.s32.totalorder %s111, %s113
    %p120 = scmp.eq.s32.totalorder %s19, 1
    %p121 = por %p119, %p120
    %p122 = scmp.ne.s32.totalorder %s113, %s114
    %p123 = scmp.eq.s32.totalorder %s19, 0
    %p124 = por %p122, %p123
    %p125 = scmp.ne.s32.totalorder %s113, %s114
    %p126 = scmp.eq.s32.totalorder %s20, 1
    %p127 = por %p125, %p126
    %p129 = scmp.ne.s32.totalorder %s114, %s128
    %p130 = scmp.eq.s32.totalorder %s20, 0
    %p131 = por %p129, %p130
    %s133 = sadd.s32 %s132, 1
    %p136 = scmp.eq.s32.totalorder %s14, 1
    %p137 = scmp.ne.s32.totalorder %s132, %s134
    %p138 = scmp.eq.s32.totalorder %s14, 0
    %p139 = por %p137, %p138
    %p140 = scmp.ne.s32.totalorder %s132, %s134
    %p141 = scmp.eq.s32.totalorder %s19, 1
    %p142 = por %p140, %p141
    %p143 = scmp.ne.s32.totalorder %s134, %s135
    %p144 = scmp.eq.s32.totalorder %s19, 0
    %p145 = por %p143, %p144
    %p146 = scmp.ne.s32.totalorder %s134, %s135
    %p147 = scmp.eq.s32.totalorder %s20, 1
    %p148 = por %p146, %p147
    %p150 = scmp.ne.s32.totalorder %s135, %s149
    %p151 = scmp.eq.s32.totalorder %s20, 0
    %p152 = por %p150, %p151
    %s154 = sadd.s32 %s153, 1
    %p157 = scmp.eq.s32.totalorder %s14, 1
    %p158 = scmp.ne.s32.totalorder %s153, %s155
    %p159 = scmp.eq.s32.totalorder %s14, 0
    %p160 = por %p158, %p159
    %p161 = scmp.ne.s32.totalorder %s153, %s155
    %p162 = scmp.eq.s32.totalorder %s19, 1
    %p163 = por %p161, %p162
    %p164 = scmp.ne.s32.totalorder %s155, %s156
    %p165 = scmp.eq.s32.totalorder %s19, 0
    %p166 = por %p164, %p165
    %p167 = scmp.ne.s32.totalorder %s155, %s156
    %p168 = scmp.eq.s32.totalorder %s20, 1
    %p169 = por %p167, %p168
    %p171 = scmp.ne.s32.totalorder %s156, %s170
    %p172 = scmp.eq.s32.totalorder %s20, 0
    %p173 = por %p171, %p172
    %s175 = sadd.s32 %s174, 1
    %p178 = scmp.eq.s32.totalorder %s14, 1
    %p179 = scmp.ne.s32.totalorder %s174, %s176
    %p180 = scmp.eq.s32.totalorder %s14, 0
    %p181 = por %p179, %p180
    %p182 = scmp.ne.s32.totalorder %s174, %s176
    %p183 = scmp.eq.s32.totalorder %s19, 1
    %p184 = por %p182, %p183
    %p185 = scmp.ne.s32.totalorder %s176, %s177
    %p186 = scmp.eq.s32.totalorder %s19, 0
    %p187 = por %p185, %p186
    %p188 = scmp.ne.s32.totalorder %s176, %s177
    %p189 = scmp.eq.s32.totalorder %s20, 1
    %p190 = por %p188, %p189
    %p192 = scmp.ne.s32.totalorder %s177, %s191
    %p193 = scmp.eq.s32.totalorder %s20, 0
    %p194 = por %p192, %p193
    %s195 = ssub.s32 %s14, %s21
    %p196 = scmp.eq.s32.totalorder %s195, 0
    %s198 = sadd.s32 %s197, 1
    %s199 = scalar_select %p196, %s197, %s198
    %p202 = pneg %p196
    %p203 = scmp.eq.s32.totalorder %s14, 1
    %p204 = por %p202, %p203
    %p205 = scmp.ne.s32.totalorder %s197, %s200
    %p206 = scmp.eq.s32.totalorder %s14, 0
    %p207 = por %p205, %p206
    %p208 = scmp.ne.s32.totalorder %s197, %s200
    %p209 = scmp.eq.s32.totalorder %s19, 1
    %p210 = por %p208, %p209
    %p211 = scmp.ne.s32.totalorder %s200, %s201
    %p212 = scmp.eq.s32.totalorder %s19, 0
    %p213 = por %p211, %p212
    %p214 = scmp.ne.s32.totalorder %s200, %s201
    %p215 = scmp.eq.s32.totalorder %s20, 1
    %p216 = por %p214, %p215
    %p218 = scmp.ne.s32.totalorder %s201, %s217
    %p219 = scmp.eq.s32.totalorder %s20, 0
    %p220 = por %p218, %p219
    %p221 = scmp.le.s32.totalorder 1, %s14
    %p222 = scmp.lt.s32.totalorder %s14, 3
    %p223 = pnand %p221, %p222
    %p224 = pneg %p223
    // Predicated region
    $region9: #{tpu_custom_call.1} parent=5 // pred_check
      _
    $region10: #{tpu_custom_call.1} parent=5 // pred_check_branch
      %226 = sbr.rel (%p223) target = $region12
    $region11: #{tpu_custom_call.1} parent=5 // pred_region
      %s227 = ssub.s32 %s14, 1
      // Predicated region
      $region13: #{tpu_custom_call.1} parent=11 // pred_check
        %p228 = pneg %p61
      $region14: #{tpu_custom_call.1} parent=11 // pred_check_branch
        %230 = sbr.rel (%p228) target = $region16
      $region15: #{tpu_custom_call.1} parent=11 // pred_region
        _
      $region16: #{tpu_custom_call.1} parent=11 // pred_fallthru
        _
      // Predicated region
      $region17: #{tpu_custom_call.1} parent=11 // pred_check
        %p231 = pneg %p82
      $region18: #{tpu_custom_call.1} parent=11 // pred_check_branch
        %233 = sbr.rel (%p231) target = $region20
      $region19: #{tpu_custom_call.1} parent=11 // pred_region
        _
      $region20: #{tpu_custom_call.1} parent=11 // pred_fallthru
        _
      // Predicated region
      $region21: #{tpu_custom_call.1} parent=11 // pred_check
        %p234 = pneg %p103
      $region22: #{tpu_custom_call.1} parent=11 // pred_check_branch
        %236 = sbr.rel (%p234) target = $region24
      $region23: #{tpu_custom_call.1} parent=11 // pred_region
        _
      $region24: #{tpu_custom_call.1} parent=11 // pred_fallthru
        _
      // Predicated region
      $region25: #{tpu_custom_call.1} parent=11 // pred_check
        %p237 = pneg %p124
      $region26: #{tpu_custom_call.1} parent=11 // pred_check_branch
        %239 = sbr.rel (%p237) target = $region28
      $region27: #{tpu_custom_call.1} parent=11 // pred_region
        _
      $region28: #{tpu_custom_call.1} parent=11 // pred_fallthru
        _
      // Predicated region
      $region29: #{tpu_custom_call.1} parent=11 // pred_check
        %p240 = pneg %p145
      $region30: #{tpu_custom_call.1} parent=11 // pred_check_branch
        %242 = sbr.rel (%p240) target = $region32
      $region31: #{tpu_custom_call.1} parent=11 // pred_region
        _
      $region32: #{tpu_custom_call.1} parent=11 // pred_fallthru
        _
      // Predicated region
      $region33: #{tpu_custom_call.1} parent=11 // pred_check
        %p243 = pneg %p166
      $region34: #{tpu_custom_call.1} parent=11 // pred_check_branch
        %245 = sbr.rel (%p243) target = $region36
      $region35: #{tpu_custom_call.1} parent=11 // pred_region
        _
      $region36: #{tpu_custom_call.1} parent=11 // pred_fallthru
        _
      // Predicated region
      $region37: #{tpu_custom_call.1} parent=11 // pred_check
        %p246 = pneg %p187
      $region38: #{tpu_custom_call.1} parent=11 // pred_check_branch
        %248 = sbr.rel (%p246) target = $region40
      $region39: #{tpu_custom_call.1} parent=11 // pred_region
        _
      $region40: #{tpu_custom_call.1} parent=11 // pred_fallthru
        _
    $region12: #{tpu_custom_call.1} parent=5 // pred_fallthru
      _
    %p249 = scmp.lt.s32.totalorder %s14, 2
    // Predicated region
    $region41: #{tpu_custom_call.1} parent=5 // pred_check
      %p250 = pneg %p249
    $region42: #{tpu_custom_call.1} parent=5 // pred_check_branch
      %252 = sbr.rel (%p250) target = $region44
    $region43: #{tpu_custom_call.1} parent=5 // pred_region
      // Predicated region
      $region45: #{tpu_custom_call.1} parent=43 // pred_check
        %p253 = pneg %p34
      $region46: #{tpu_custom_call.1} parent=43 // pred_check_branch
        %255 = sbr.rel (%p253) target = $region48
      $region47: #{tpu_custom_call.1} parent=43 // pred_region
        %p256 = scmp.lt.s32.totalorder %s14, 1
        %s257 = scalar_select %p256, %s14, 1
        %s258 = smul.addr %s257, 6
        %s259 = smul.addr %s258, 8
        %s260 = scalar_lea.vmem %s0, %s259
      $region48: #{tpu_custom_call.1} parent=43 // pred_fallthru
        _
    $region44: #{tpu_custom_call.1} parent=5 // pred_fallthru
      _
    %p261 = scmp.le.s32.totalorder 1, %s14
    %p262 = scmp.lt.s32.totalorder %s14, 3
    %p263 = pnand %p261, %p262
    %p264 = pneg %p263
    // Predicated region
    $region49: #{tpu_custom_call.1} parent=5 // pred_check
      _
    $region50: #{tpu_custom_call.1} parent=5 // pred_check_branch
      %266 = sbr.rel (%p263) target = $region52
    $region51: #{tpu_custom_call.1} parent=5 // pred_region
      %s267 = ssub.s32 %s14, 1
      %p268 = scmp.lt.s32.totalorder %s19, 1
      %s269 = scalar_select %p268, %s19, 1
      %s270 = smul.addr %s269, 6
      %s271 = smul.addr %s270, 8
      %s272 = scalar_lea.vmem %s0, %s271
      %p273 = pneg %p40
      %p274 = pneg %p37
      %p275 = pneg %p61
      %p276 = pneg %p58
      %p277 = pneg %p82
      %p278 = pneg %p79
      %p279 = pneg %p103
      %p280 = pneg %p100
      %p281 = pneg %p124
      %p282 = pneg %p121
      %p283 = pneg %p145
      %p284 = pneg %p142
      %p285 = pneg %p166
      %p286 = pneg %p163
      %p287 = pneg %p187
      %p288 = pneg %p184
      %p289 = pneg %p213
      %p290 = pneg %p210
      %p291 = scmp.lt.s32.totalorder %s19, 1
      %s292 = scalar_select %p291, %s19, 1
      %s293 = smul.addr %s292, 6
      %s294 = smul.addr %s293, 8
      %s295 = scalar_lea.vmem %s8, %s294
      %p296 = scmp.lt.s32.totalorder %s19, 1
      %s297 = scalar_select %p296, %s19, 1
      %s298 = smul.addr %s297, 6
      %s299 = smul.addr %s298, 8
      %s300 = scalar_lea.vmem %s0, %s299
      %p301 = scmp.lt.s32.totalorder %s19, 1
      %s302 = scalar_select %p301, %s19, 1
      %s303 = smul.addr %s302, 6
      %s304 = smul.addr %s303, 8
      %s305 = scalar_lea.vmem %s8, %s304
      %v306 = vld [vmem:[%s300] sm:$0xff]
      %v307 = vld [vmem:[%s300 + $0x8] sm:$0xff]
      %v308 = vld [vmem:[%s300 + $0x10] sm:$0xff]
      %v309 = vld [vmem:[%s300 + $0x18] sm:$0xff]
      %v310 = vld [vmem:[%s300 + $0x20] sm:$0xff]
      %v311 = vld [vmem:[%s300 + $0x28] sm:$0x1f]
      %v312 = vld [vmem:[%s1] sm:$0xff]
      %v313 = vld [vmem:[%s1 + $0x8] sm:$0xff]
      %v314 = vld [vmem:[%s1 + $0x10] sm:$0xff]
      %v315 = vld [vmem:[%s1 + $0x18] sm:$0xff]
      %v316 = vld [vmem:[%s1 + $0x20] sm:$0x1]
      %v317 = vperm.slane %v316, 0
      %vm318 = vcmask 261120
      %v320 = vsel %vm318, %v306, 0
      %v323 = vsel %vm318, %v307, 0
      %v326 = vsel %vm318, %v308, 0
      %v329 = vsel %vm318, %v309, 0
      %v332 = vsel %vm318, %v310, 0
      %v335 = vsel %vm318, %v311, 0
      %337 = vmatpush.msra.mxu0 0.0
      %338 = vmatpush.msra.mxu0 0.0
      %339 = vmatpush.msra.mxu0 0.0
      %340 = vmatpush.msra.mxu0 0.0
      %341 = vmatpush.msra.mxu0 0.0
      %342 = vmatpush.msra.mxu0 0.0
      %343 = vmatpush.msra.mxu0 0.0
      %344 = vmatpush.msra.mxu0 0.0
      %345 = vmatpush.msra.mxu0 0.0
      %346 = vmatpush.msra.mxu0 0.0
      %347 = vmatpush.msra.mxu0 0.0
      %348 = vmatpush.msra.mxu0 0.0
      %349 = vmatpush.msra.mxu0 %v315
      %350 = vmatpush.msra.mxu0 %v314
      %351 = vmatpush.msra.mxu0 %v313
      %352 = vmatpush.msra.mxu0 %v312
      %353 = vmatmul.f32.gmra.mxu0 %v320
      %v354 = vpop.f32.mrf.mxu0
      %v355 = vadd.f32 %v317, %v354
      %356 = vmatmul.f32.gmra.mxu0 %v323
      %v357 = vpop.f32.mrf.mxu0
      %v358 = vadd.f32 %v317, %v357
      %359 = vmatmul.f32.gmra.mxu0 %v326
      %v360 = vpop.f32.mrf.mxu0
      %v361 = vadd.f32 %v317, %v360
      %362 = vmatmul.f32.gmra.mxu0 %v329
      %v363 = vpop.f32.mrf.mxu0
      %v364 = vadd.f32 %v317, %v363
      %365 = vmatmul.f32.gmra.mxu0 %v332
      %v366 = vpop.f32.mrf.mxu0
      %v367 = vadd.f32 %v317, %v366
      %368 = vmatmul.f32.gmra.mxu0 %v335
      %v369 = vpop.f32.mrf.mxu0
      %v370 = vadd.f32 %v317, %v369
      %371 = vdwg.mxu0
      %378 = vrot.lane.b32.xlu0 %v355, 96
      %v379 = vpop.permute.xlu0 %378
      %380 = vrot.lane.b32.xlu0 %v358, 96
      %v381 = vpop.permute.xlu0 %380
      %382 = vrot.lane.b32.xlu0 %v361, 96
      %v383 = vpop.permute.xlu0 %382
      %384 = vrot.lane.b32.xlu0 %v364, 96
      %v385 = vpop.permute.xlu0 %384
      %386 = vrot.lane.b32.xlu0 %v367, 96
      %v387 = vpop.permute.xlu0 %386
      %388 = vrot.lane.b32.xlu0 %v370, 96
      %v389 = vpop.permute.xlu0 %388
      %v390 = vsel %vm318, %v355, 0
      %v392 = vsel %vm318, %v358, 0
      %v394 = vsel %vm318, %v361, 0
      %v396 = vsel %vm318, %v364, 0
      %v398 = vsel %vm318, %v367, 0
      %v400 = vsel %vm318, %v370, 0
      %v402 = vsel %vm318, %v379, 0
      %v404 = vsel %vm318, %v381, 0
      %v406 = vsel %vm318, %v383, 0
      %v408 = vsel %vm318, %v385, 0
      %v410 = vsel %vm318, %v387, 0
      %v412 = vsel %vm318, %v389, 0
      %414 = vmatpush.xpose.msra.mxu0 0.0
      %415 = vmatpush.xpose.msra.mxu0 0.0
      %416 = vmatpush.xpose.msra.mxu0 0.0
      %417 = vmatpush.xpose.msra.mxu0 0.0
      %418 = vmatpush.xpose.msra.mxu0 0.0
      %419 = vmatpush.xpose.msra.mxu0 0.0
      %420 = vmatpush.xpose.msra.mxu0 0.0
      %421 = vmatpush.xpose.msra.mxu0 0.0
      %422 = vmatpush.xpose.msra.mxu0 0.0
      %423 = vmatpush.xpose.msra.mxu0 0.0
      %424 = vmatpush.xpose.msra.mxu0 %v412
      %425 = vmatpush.xpose.msra.mxu0 %v410
      %426 = vmatpush.xpose.msra.mxu0 %v408
      %427 = vmatpush.xpose.msra.mxu0 %v406
      %428 = vmatpush.xpose.msra.mxu0 %v404
      %429 = vmatpush.xpose.msra.mxu0 %v402
      %430 = vmatmul.f32.gmra.mxu0 %v390
      %v431 = vpop.f32.mrf.mxu0
      %v432 = vadd.f32 0.0, %v431
      %433 = vmatmul.f32.gmra.mxu0 %v392
      %v434 = vpop.f32.mrf.mxu0
      %v435 = vadd.f32 0.0, %v434
      %436 = vmatmul.f32.gmra.mxu0 %v394
      %v437 = vpop.f32.mrf.mxu0
      %v438 = vadd.f32 0.0, %v437
      %439 = vmatmul.f32.gmra.mxu0 %v396
      %v440 = vpop.f32.mrf.mxu0
      %v441 = vadd.f32 0.0, %v440
      %442 = vmatmul.f32.gmra.mxu0 %v398
      %v443 = vpop.f32.mrf.mxu0
      %v444 = vadd.f32 0.0, %v443
      %445 = vmatmul.f32.gmra.mxu0 %v400
      %v446 = vpop.f32.mrf.mxu0
      %v447 = vadd.f32 0.0, %v446
      %448 = vdwg.mxu0
      %v449 = vmul.f32 %v432, 0.17677669
      %v450 = vmul.f32 %v435, 0.17677669
      %v451 = vmul.f32 %v438, 0.17677669
      %v452 = vmul.f32 %v441, 0.17677669
      %v453 = vmul.f32 %v444, 0.17677669
      %v454 = vmul.f32 %v447, 0.17677669
      %vm455 = vcmask 367616
      %v456 = vsel %vm455, %v449, -inf
      %457 = vmax.xlane.f32.xlu0 %v456
      %v458 = vpop.xlane.xlu0 %457
      %v459 = vsel %vm455, %v450, -inf
      %460 = vmax.xlane.f32.xlu0 %v459
      %v461 = vpop.xlane.xlu0 %460
      %v462 = vsel %vm455, %v451, -inf
      %463 = vmax.xlane.f32.xlu0 %v462
      %v464 = vpop.xlane.xlu0 %463
      %v465 = vsel %vm455, %v452, -inf
      %466 = vmax.xlane.f32.xlu0 %v465
      %v467 = vpop.xlane.xlu0 %466
      %v468 = vsel %vm455, %v453, -inf
      %469 = vmax.xlane.f32.xlu0 %v468
      %v470 = vpop.xlane.xlu0 %469
      %vm471 = vcmask 364544
      %v472 = vsel %vm471, %v454, -inf
      %473 = vmax.xlane.f32.xlu0 %v472
      %v474 = vpop.xlane.xlu0 %473
      %v475 = vsub.f32 %v449, %v458
      %v476 = vsub.f32 %v450, %v461
      %v477 = vsub.f32 %v451, %v464
      %v478 = vsub.f32 %v452, %v467
      %v479 = vsub.f32 %v453, %v470
      %v480 = vsub.f32 %v454, %v474
      %v481 = vmul.f32 %v475, 1.442695
      %v482 = vpow.pop %v481
      %v483 = vmul.f32 %v476, 1.442695
      %v484 = vpow.pop %v483
      %v485 = vmul.f32 %v477, 1.442695
      %v486 = vpow.pop %v485
      %v487 = vmul.f32 %v478, 1.442695
      %v488 = vpow.pop %v487
      %v489 = vmul.f32 %v479, 1.442695
      %v490 = vpow.pop %v489
      %v491 = vmul.f32 %v480, 1.442695
      %v492 = vpow.pop %v491
      %v493 = vsel %vm455, %v482, 0.0
      %494 = vadd.xlane.f32.xlu0 %v493
      %v495 = vpop.xlane.xlu0 %494
      %v496 = vsel %vm455, %v484, 0.0
      %497 = vadd.xlane.f32.xlu0 %v496
      %v498 = vpop.xlane.xlu0 %497
      %v499 = vsel %vm455, %v486, 0.0
      %500 = vadd.xlane.f32.xlu0 %v499
      %v501 = vpop.xlane.xlu0 %500
      %v502 = vsel %vm455, %v488, 0.0
      %503 = vadd.xlane.f32.xlu0 %v502
      %v504 = vpop.xlane.xlu0 %503
      %v505 = vsel %vm455, %v490, 0.0
      %506 = vadd.xlane.f32.xlu0 %v505
      %v507 = vpop.xlane.xlu0 %506
      %v508 = vsel %vm471, %v492, 0.0
      %509 = vadd.xlane.f32.xlu0 %v508
      %v510 = vpop.xlane.xlu0 %509
      %v511 = vrcp.pop %v495
      %v512 = vrcp.pop %v498
      %v513 = vrcp.pop %v501
      %v514 = vrcp.pop %v504
      %v515 = vrcp.pop %v507
      %v516 = vrcp.pop %v510
      %v517 = vmul.f32 %v482, %v511
      %v518 = vmul.f32 %v484, %v512
      %v519 = vmul.f32 %v486, %v513
      %v520 = vmul.f32 %v488, %v514
      %v521 = vmul.f32 %v490, %v515
      %v522 = vmul.f32 %v492, %v516
      %523 = vrot.lane.b32.xlu0 %v355, 64
      %v524 = vpop.permute.xlu0 %523
      %525 = vrot.lane.b32.xlu0 %v358, 64
      %v526 = vpop.permute.xlu0 %525
      %527 = vrot.lane.b32.xlu0 %v361, 64
      %v528 = vpop.permute.xlu0 %527
      %529 = vrot.lane.b32.xlu0 %v364, 64
      %v530 = vpop.permute.xlu0 %529
      %531 = vrot.lane.b32.xlu0 %v367, 64
      %v532 = vpop.permute.xlu0 %531
      %533 = vrot.lane.b32.xlu0 %v370, 64
      %v534 = vpop.permute.xlu0 %533
      %v541 = vsel %vm455, %v517, 0
      %v544 = vsel %vm455, %v518, 0
      %v547 = vsel %vm455, %v519, 0
      %v550 = vsel %vm455, %v520, 0
      %v553 = vsel %vm455, %v521, 0
      %v556 = vsel %vm455, %v522, 0
      %vm558 = vcmask 1044480
      %v559 = vsel %vm558, %v534, 0
      %561 = vmatpush.msra.mxu0 0.0
      %562 = vmatpush.msra.mxu0 0.0
      %563 = vmatpush.msra.mxu0 0.0
      %564 = vmatpush.msra.mxu0 0.0
      %565 = vmatpush.msra.mxu0 0.0
      %566 = vmatpush.msra.mxu0 0.0
      %567 = vmatpush.msra.mxu0 0.0
      %568 = vmatpush.msra.mxu0 0.0
      %569 = vmatpush.msra.mxu0 0.0
      %570 = vmatpush.msra.mxu0 0.0
      %571 = vmatpush.msra.mxu0 %v559
      %572 = vmatpush.msra.mxu0 %v532
      %573 = vmatpush.msra.mxu0 %v530
      %574 = vmatpush.msra.mxu0 %v528
      %575 = vmatpush.msra.mxu0 %v526
      %576 = vmatpush.msra.mxu0 %v524
      %577 = vmatmul.f32.gmra.mxu0 %v541
      %v578 = vpop.f32.mrf.mxu0
      %v579 = vadd.f32 0.0, %v578
      %580 = vmatmul.f32.gmra.mxu0 %v544
      %v581 = vpop.f32.mrf.mxu0
      %v582 = vadd.f32 0.0, %v581
      %583 = vmatmul.f32.gmra.mxu0 %v547
      %v584 = vpop.f32.mrf.mxu0
      %v585 = vadd.f32 0.0, %v584
      %586 = vmatmul.f32.gmra.mxu0 %v550
      %v587 = vpop.f32.mrf.mxu0
      %v588 = vadd.f32 0.0, %v587
      %589 = vmatmul.f32.gmra.mxu0 %v553
      %v590 = vpop.f32.mrf.mxu0
      %v591 = vadd.f32 0.0, %v590
      %592 = vmatmul.f32.gmra.mxu0 %v556
      %v593 = vpop.f32.mrf.mxu0
      %v594 = vadd.f32 0.0, %v593
      %595 = vdwg.mxu0
      %v596 = vld [vmem:[%s2] sm:$0xff]
      %v597 = vld [vmem:[%s2 + $0x8] sm:$0xff]
      %v598 = vld [vmem:[%s2 + $0x10] sm:$0xff]
      %v599 = vld [vmem:[%s2 + $0x18] sm:$0xff]
      %v600 = vld [vmem:[%s2 + $0x20] sm:$0x1]
      %v601 = vperm.slane %v600, 0
      %v603 = vsel %vm318, %v579, 0
      %v606 = vsel %vm318, %v582, 0
      %v609 = vsel %vm318, %v585, 0
      %v612 = vsel %vm318, %v588, 0
      %v615 = vsel %vm318, %v591, 0
      %v618 = vsel %vm318, %v594, 0
      %620 = vmatpush.msra.mxu0 0.0
      %621 = vmatpush.msra.mxu0 0.0
      %622 = vmatpush.msra.mxu0 0.0
      %623 = vmatpush.msra.mxu0 0.0
      %624 = vmatpush.msra.mxu0 0.0
      %625 = vmatpush.msra.mxu0 0.0
      %626 = vmatpush.msra.mxu0 0.0
      %627 = vmatpush.msra.mxu0 0.0
      %628 = vmatpush.msra.mxu0 0.0
      %629 = vmatpush.msra.mxu0 0.0
      %630 = vmatpush.msra.mxu0 0.0
      %631 = vmatpush.msra.mxu0 0.0
      %632 = vmatpush.msra.mxu0 %v599
      %633 = vmatpush.msra.mxu0 %v598
      %634 = vmatpush.msra.mxu0 %v597
      %635 = vmatpush.msra.mxu0 %v596
      %636 = vmatmul.f32.gmra.mxu0 %v603
      %v637 = vpop.f32.mrf.mxu0
      %v638 = vadd.f32 %v601, %v637
      %639 = vmatmul.f32.gmra.mxu0 %v606
      %v640 = vpop.f32.mrf.mxu0
      %v641 = vadd.f32 %v601, %v640
      %642 = vmatmul.f32.gmra.mxu0 %v609
      %v643 = vpop.f32.mrf.mxu0
      %v644 = vadd.f32 %v601, %v643
      %645 = vmatmul.f32.gmra.mxu0 %v612
      %v646 = vpop.f32.mrf.mxu0
      %v647 = vadd.f32 %v601, %v646
      %648 = vmatmul.f32.gmra.mxu0 %v615
      %v649 = vpop.f32.mrf.mxu0
      %v650 = vadd.f32 %v601, %v649
      %651 = vmatmul.f32.gmra.mxu0 %v618
      %v652 = vpop.f32.mrf.mxu0
      %v653 = vadd.f32 %v601, %v652
      %654 = vdwg.mxu0
      %v655 = vld [vmem:[%s3] sm:$0xff]
      %v656 = vld [vmem:[%s3 + $0x8] sm:$0xff]
      %v657 = vld [vmem:[%s3 + $0x10] sm:$0xff]
      %v658 = vld [vmem:[%s3 + $0x18] sm:$0xff]
      %v659 = vld [vmem:[%s3 + $0x20] sm:$0xff]
      %v660 = vld [vmem:[%s3 + $0x28] sm:$0xff]
      %v661 = vld [vmem:[%s3 + $0x30] sm:$0xff]
      %v662 = vld [vmem:[%s3 + $0x38] sm:$0xff]
      %v663 = vld [vmem:[%s3 + $0x40] sm:$0xff]
      %v664 = vld [vmem:[%s3 + $0x48] sm:$0xff]
      %v665 = vld [vmem:[%s3 + $0x50] sm:$0x3f]
      %v666 = vld [vmem:[%s3 + $0x58] sm:$0x3f]
      %v667 = vperm.slane %v665, 5
      %v668 = vperm.slane %v666, 5
      %669 = vxpose.xlu0.b32.start [1/16] %v638, 128
      %670 = vxpose.xlu0.b32.cont [2/16] %v641, 128
      %671 = vxpose.xlu0.b32.cont [3/16] %v644, 128
      %672 = vxpose.xlu0.b32.cont [4/16] %v647, 128
      %673 = vxpose.xlu0.b32.cont [5/16] %v650, 128
      %674 = vxpose.xlu0.b32.cont [6/16] %v653, 128
      %675 = vxpose.xlu0.b32.cont [7/16] 0.0, 128
      %676 = vxpose.xlu0.b32.cont [8/16] 0.0, 128
      %677 = vxpose.xlu0.b32.cont [9/16] 0.0, 128
      %678 = vxpose.xlu0.b32.cont [10/16] 0.0, 128
      %679 = vxpose.xlu0.b32.cont [11/16] 0.0, 128
      %680 = vxpose.xlu0.b32.cont [12/16] 0.0, 128
      %681 = vxpose.xlu0.b32.cont [13/16] 0.0, 128
      %682 = vxpose.xlu0.b32.cont [14/16] 0.0, 128
      %683 = vxpose.xlu0.b32.cont [15/16] 0.0, 128
      %684 = vxpose.xlu0.b32.end [16/16] 0.0, 128
      %v685 = vpop.trf.xlu0
      %v686 = vpop.trf.xlu0
      %v687 = vpop.trf.xlu0
      %v688 = vpop.trf.xlu0
      %v689 = vpop.trf.xlu0
      %v690 = vpop.trf.xlu0
      %v691 = vpop.trf.xlu0
      %v692 = vpop.trf.xlu0
      %v693 = vpop.trf.xlu0
      %v694 = vpop.trf.xlu0
      %v695 = vpop.trf.xlu0
      %v696 = vpop.trf.xlu0
      %v697 = vpop.trf.xlu0
      %v698 = vpop.trf.xlu0
      %v699 = vpop.trf.xlu0
      %v700 = vpop.trf.xlu0
      %v702 = vsel %vm455, %v685, 0
      %v705 = vsel %vm455, %v686, 0
      %v708 = vsel %vm455, %v687, 0
      %v711 = vsel %vm455, %v688, 0
      %v714 = vsel %vm558, %v665, 0
      %v717 = vsel %vm558, %v666, 0
      %719 = vmatpush.msra.mxu0 0.0
      %720 = vmatpush.msra.mxu0 0.0
      %721 = vmatpush.msra.mxu0 0.0
      %722 = vmatpush.msra.mxu0 0.0
      %723 = vmatpush.msra.mxu0 0.0
      %724 = vmatpush.msra.mxu0 0.0
      %725 = vmatpush.msra.mxu0 0.0
      %726 = vmatpush.msra.mxu0 0.0
      %727 = vmatpush.msra.mxu0 0.0
      %728 = vmatpush.msra.mxu0 0.0
      %729 = vmatpush.msra.mxu0 %v714
      %730 = vmatpush.msra.mxu0 %v663
      %731 = vmatpush.msra.mxu0 %v661
      %732 = vmatpush.msra.mxu0 %v659
      %733 = vmatpush.msra.mxu0 %v657
      %734 = vmatpush.msra.mxu0 %v655
      %735 = vmatmul.f32.gmra.mxu0 %v702
      %v736 = vpop.f32.mrf.mxu0
      %v737 = vadd.f32 %v667, %v736
      %738 = vmatmul.f32.gmra.mxu0 %v705
      %v739 = vpop.f32.mrf.mxu0
      %v740 = vadd.f32 %v667, %v739
      %741 = vmatmul.f32.gmra.mxu0 %v708
      %v742 = vpop.f32.mrf.mxu0
      %v743 = vadd.f32 %v667, %v742
      %744 = vmatmul.f32.gmra.mxu0 %v711
      %v745 = vpop.f32.mrf.mxu0
      %v746 = vadd.f32 %v667, %v745
      %747 = vdwg.mxu0
      %748 = vmatpush.msra.mxu0 0.0
      %749 = vmatpush.msra.mxu0 0.0
      %750 = vmatpush.msra.mxu0 0.0
      %751 = vmatpush.msra.mxu0 0.0
      %752 = vmatpush.msra.mxu0 0.0
      %753 = vmatpush.msra.mxu0 0.0
      %754 = vmatpush.msra.mxu0 0.0
      %755 = vmatpush.msra.mxu0 0.0
      %756 = vmatpush.msra.mxu0 0.0
      %757 = vmatpush.msra.mxu0 0.0
      %758 = vmatpush.msra.mxu0 %v717
      %759 = vmatpush.msra.mxu0 %v664
      %760 = vmatpush.msra.mxu0 %v662
      %761 = vmatpush.msra.mxu0 %v660
      %762 = vmatpush.msra.mxu0 %v658
      %763 = vmatpush.msra.mxu0 %v656
      %764 = vmatmul.f32.gmra.mxu0 %v702
      %v765 = vpop.f32.mrf.mxu0
      %v766 = vadd.f32 %v668, %v765
      %767 = vmatmul.f32.gmra.mxu0 %v705
      %v768 = vpop.f32.mrf.mxu0
      %v769 = vadd.f32 %v668, %v768
      %770 = vmatmul.f32.gmra.mxu0 %v708
      %v771 = vpop.f32.mrf.mxu0
      %v772 = vadd.f32 %v668, %v771
      %773 = vmatmul.f32.gmra.mxu0 %v711
      %v774 = vpop.f32.mrf.mxu0
      %v775 = vadd.f32 %v668, %v774
      %776 = vdwg.mxu0
      %v777 = vld [vmem:[%s4] sm:$0xff]
      %v778 = vld [vmem:[%s4 + $0x8] sm:$0xff]
      %v779 = vld [vmem:[%s4 + $0x10] sm:$0xff]
      %v780 = vld [vmem:[%s4 + $0x18] sm:$0xff]
      %v781 = vld [vmem:[%s4 + $0x20] sm:$0xff]
      %v782 = vld [vmem:[%s4 + $0x28] sm:$0x1f]
      %787 = vrot.lane.b32.xlu0 %v737, 83
      %v788 = vpop.permute.xlu0 %787
      %789 = vrot.lane.b32.xlu0 %v740, 83
      %v790 = vpop.permute.xlu0 %789
      %791 = vrot.lane.b32.xlu0 %v743, 83
      %v792 = vpop.permute.xlu0 %791
      %793 = vrot.lane.b32.xlu0 %v746, 83
      %v794 = vpop.permute.xlu0 %793
      %vm795 = vcmask 72704
      %v796 = vsel %vm795, %v737, 0
      %v798 = vsel %vm795, %v740, 0
      %v800 = vsel %vm795, %v743, 0
      %v802 = vsel %vm795, %v746, 0
      %v804 = vsel %vm795, %v788, 0
      %v806 = vsel %vm795, %v790, 0
      %v808 = vsel %vm795, %v792, 0
      %v810 = vsel %vm795, %v794, 0
      %812 = vmatpush.xpose.msra.mxu0 0.0
      %813 = vmatpush.xpose.msra.mxu0 0.0
      %814 = vmatpush.xpose.msra.mxu0 0.0
      %815 = vmatpush.xpose.msra.mxu0 0.0
      %816 = vmatpush.xpose.msra.mxu0 0.0
      %817 = vmatpush.xpose.msra.mxu0 0.0
      %818 = vmatpush.xpose.msra.mxu0 0.0
      %819 = vmatpush.xpose.msra.mxu0 0.0
      %820 = vmatpush.xpose.msra.mxu0 0.0
      %821 = vmatpush.xpose.msra.mxu0 0.0
      %822 = vmatpush.xpose.msra.mxu0 0.0
      %823 = vmatpush.xpose.msra.mxu0 0.0
      %824 = vmatpush.xpose.msra.mxu0 %v810
      %825 = vmatpush.xpose.msra.mxu0 %v808
      %826 = vmatpush.xpose.msra.mxu0 %v806
      %827 = vmatpush.xpose.msra.mxu0 %v804
      %828 = vmatmul.f32.gmra.mxu0 %v796
      %v829 = vpop.f32.mrf.mxu0
      %v830 = vadd.f32 0.0, %v829
      %831 = vmatmul.f32.gmra.mxu0 %v798
      %v832 = vpop.f32.mrf.mxu0
      %v833 = vadd.f32 0.0, %v832
      %834 = vmatmul.f32.gmra.mxu0 %v800
      %v835 = vpop.f32.mrf.mxu0
      %v836 = vadd.f32 0.0, %v835
      %837 = vmatmul.f32.gmra.mxu0 %v802
      %v838 = vpop.f32.mrf.mxu0
      %v839 = vadd.f32 0.0, %v838
      %840 = vdwg.mxu0
      %v841 = vmul.f32 %v830, 0.33333334
      %v842 = vmul.f32 %v833, 0.33333334
      %v843 = vmul.f32 %v836, 0.33333334
      %v844 = vmul.f32 %v839, 0.33333334
      %v845 = vsel %vm318, %v841, -inf
      %846 = vmax.xlane.f32.xlu0 %v845
      %v847 = vpop.xlane.xlu0 %846
      %v848 = vsel %vm318, %v842, -inf
      %849 = vmax.xlane.f32.xlu0 %v848
      %v850 = vpop.xlane.xlu0 %849
      %v851 = vsel %vm318, %v843, -inf
      %852 = vmax.xlane.f32.xlu0 %v851
      %v853 = vpop.xlane.xlu0 %852
      %v854 = vsel %vm318, %v844, -inf
      %855 = vmax.xlane.f32.xlu0 %v854
      %v856 = vpop.xlane.xlu0 %855
      %v857 = vsub.f32 %v841, %v847
      %v858 = vsub.f32 %v842, %v850
      %v859 = vsub.f32 %v843, %v853
      %v860 = vsub.f32 %v844, %v856
      %v861 = vmul.f32 %v857, 1.442695
      %v862 = vpow.pop %v861
      %v863 = vmul.f32 %v858, 1.442695
      %v864 = vpow.pop %v863
      %v865 = vmul.f32 %v859, 1.442695
      %v866 = vpow.pop %v865
      %v867 = vmul.f32 %v860, 1.442695
      %v868 = vpow.pop %v867
      %v869 = vsel %vm318, %v862, 0.0
      %870 = vadd.xlane.f32.xlu0 %v869
      %v871 = vpop.xlane.xlu0 %870
      %v872 = vsel %vm318, %v864, 0.0
      %873 = vadd.xlane.f32.xlu0 %v872
      %v874 = vpop.xlane.xlu0 %873
      %v875 = vsel %vm318, %v866, 0.0
      %876 = vadd.xlane.f32.xlu0 %v875
      %v877 = vpop.xlane.xlu0 %876
      %v878 = vsel %vm318, %v868, 0.0
      %879 = vadd.xlane.f32.xlu0 %v878
      %v880 = vpop.xlane.xlu0 %879
      %v881 = vrcp.pop %v871
      %v882 = vrcp.pop %v874
      %v883 = vrcp.pop %v877
      %v884 = vrcp.pop %v880
      %v885 = vmul.f32 %v862, %v881
      %v886 = vmul.f32 %v864, %v882
      %v887 = vmul.f32 %v866, %v883
      %v888 = vmul.f32 %v868, %v884
      %889 = vrot.lane.b32.xlu0 %v737, 38
      %v890 = vpop.permute.xlu0 %889
      %891 = vrot.lane.b32.xlu0 %v740, 38
      %v892 = vpop.permute.xlu0 %891
      %893 = vrot.lane.b32.xlu0 %v743, 38
      %v894 = vpop.permute.xlu0 %893
      %895 = vrot.lane.b32.xlu0 %v746, 38
      %v896 = vpop.permute.xlu0 %895
      %v902 = vsel %vm318, %v885, 0
      %v905 = vsel %vm318, %v886, 0
      %v908 = vsel %vm318, %v887, 0
      %v911 = vsel %vm318, %v888, 0
      %913 = vmatpush.msra.mxu0 0.0
      %914 = vmatpush.msra.mxu0 0.0
      %915 = vmatpush.msra.mxu0 0.0
      %916 = vmatpush.msra.mxu0 0.0
      %917 = vmatpush.msra.mxu0 0.0
      %918 = vmatpush.msra.mxu0 0.0
      %919 = vmatpush.msra.mxu0 0.0
      %920 = vmatpush.msra.mxu0 0.0
      %921 = vmatpush.msra.mxu0 0.0
      %922 = vmatpush.msra.mxu0 0.0
      %923 = vmatpush.msra.mxu0 0.0
      %924 = vmatpush.msra.mxu0 0.0
      %925 = vmatpush.msra.mxu0 %v896
      %926 = vmatpush.msra.mxu0 %v894
      %927 = vmatpush.msra.mxu0 %v892
      %928 = vmatpush.msra.mxu0 %v890
      %929 = vmatmul.f32.gmra.mxu0 %v902
      %v930 = vpop.f32.mrf.mxu0
      %v931 = vadd.f32 0.0, %v930
      %932 = vmatmul.f32.gmra.mxu0 %v905
      %v933 = vpop.f32.mrf.mxu0
      %v934 = vadd.f32 0.0, %v933
      %935 = vmatmul.f32.gmra.mxu0 %v908
      %v936 = vpop.f32.mrf.mxu0
      %v937 = vadd.f32 0.0, %v936
      %938 = vmatmul.f32.gmra.mxu0 %v911
      %v939 = vpop.f32.mrf.mxu0
      %v940 = vadd.f32 0.0, %v939
      %941 = vdwg.mxu0
      %942 = vrot.lane.b32.xlu0 %v737, 119
      %v943 = vpop.permute.xlu0 %942
      %944 = vrot.lane.b32.xlu0 %v740, 119
      %v945 = vpop.permute.xlu0 %944
      %946 = vrot.lane.b32.xlu0 %v743, 119
      %v947 = vpop.permute.xlu0 %946
      %948 = vrot.lane.b32.xlu0 %v746, 119
      %v949 = vpop.permute.xlu0 %948
      %950 = vrot.lane.b32.xlu0 %v737, 74
      %v951 = vpop.permute.xlu0 %950
      %952 = vrot.lane.b32.xlu0 %v740, 74
      %v953 = vpop.permute.xlu0 %952
      %954 = vrot.lane.b32.xlu0 %v743, 74
      %v955 = vpop.permute.xlu0 %954
      %956 = vrot.lane.b32.xlu0 %v746, 74
      %v957 = vpop.permute.xlu0 %956
      %v958 = vsel %vm795, %v943, 0
      %v960 = vsel %vm795, %v945, 0
      %v962 = vsel %vm795, %v947, 0
      %v964 = vsel %vm795, %v949, 0
      %v966 = vsel %vm795, %v951, 0
      %v968 = vsel %vm795, %v953, 0
      %v970 = vsel %vm795, %v955, 0
      %v972 = vsel %vm795, %v957, 0
      %974 = vmatpush.xpose.msra.mxu0 0.0
      %975 = vmatpush.xpose.msra.mxu0 0.0
      %976 = vmatpush.xpose.msra.mxu0 0.0
      %977 = vmatpush.xpose.msra.mxu0 0.0
      %978 = vmatpush.xpose.msra.mxu0 0.0
      %979 = vmatpush.xpose.msra.mxu0 0.0
      %980 = vmatpush.xpose.msra.mxu0 0.0
      %981 = vmatpush.xpose.msra.mxu0 0.0
      %982 = vmatpush.xpose.msra.mxu0 0.0
      %983 = vmatpush.xpose.msra.mxu0 0.0
      %984 = vmatpush.xpose.msra.mxu0 0.0
      %985 = vmatpush.xpose.msra.mxu0 0.0
      %986 = vmatpush.xpose.msra.mxu0 %v972
      %987 = vmatpush.xpose.msra.mxu0 %v970
      %988 = vmatpush.xpose.msra.mxu0 %v968
      %989 = vmatpush.xpose.msra.mxu0 %v966
      %990 = vmatmul.f32.gmra.mxu0 %v958
      %v991 = vpop.f32.mrf.mxu0
      %v992 = vadd.f32 0.0, %v991
      %993 = vmatmul.f32.gmra.mxu0 %v960
      %v994 = vpop.f32.mrf.mxu0
      %v995 = vadd.f32 0.0, %v994
      %996 = vmatmul.f32.gmra.mxu0 %v962
      %v997 = vpop.f32.mrf.mxu0
      %v998 = vadd.f32 0.0, %v997
      %999 = vmatmul.f32.gmra.mxu0 %v964
      %v1000 = vpop.f32.mrf.mxu0
      %v1001 = vadd.f32 0.0, %v1000
      %1002 = vdwg.mxu0
      %v1003 = vmul.f32 %v992, 0.33333334
      %v1004 = vmul.f32 %v995, 0.33333334
      %v1005 = vmul.f32 %v998, 0.33333334
      %v1006 = vmul.f32 %v1001, 0.33333334
      %v1007 = vsel %vm318, %v1003, -inf
      %1008 = vmax.xlane.f32.xlu0 %v1007
      %v1009 = vpop.xlane.xlu0 %1008
      %v1010 = vsel %vm318, %v1004, -inf
      %1011 = vmax.xlane.f32.xlu0 %v1010
      %v1012 = vpop.xlane.xlu0 %1011
      %v1013 = vsel %vm318, %v1005, -inf
      %1014 = vmax.xlane.f32.xlu0 %v1013
      %v1015 = vpop.xlane.xlu0 %1014
      %v1016 = vsel %vm318, %v1006, -inf
      %1017 = vmax.xlane.f32.xlu0 %v1016
      %v1018 = vpop.xlane.xlu0 %1017
      %v1019 = vsub.f32 %v1003, %v1009
      %v1020 = vsub.f32 %v1004, %v1012
      %v1021 = vsub.f32 %v1005, %v1015
      %v1022 = vsub.f32 %v1006, %v1018
      %v1023 = vmul.f32 %v1019, 1.442695
      %v1024 = vpow.pop %v1023
      %v1025 = vmul.f32 %v1020, 1.442695
      %v1026 = vpow.pop %v1025
      %v1027 = vmul.f32 %v1021, 1.442695
      %v1028 = vpow.pop %v1027
      %v1029 = vmul.f32 %v1022, 1.442695
      %v1030 = vpow.pop %v1029
      %v1031 = vsel %vm318, %v1024, 0.0
      %1032 = vadd.xlane.f32.xlu0 %v1031
      %v1033 = vpop.xlane.xlu0 %1032
      %v1034 = vsel %vm318, %v1026, 0.0
      %1035 = vadd.xlane.f32.xlu0 %v1034
      %v1036 = vpop.xlane.xlu0 %1035
      %v1037 = vsel %vm318, %v1028, 0.0
      %1038 = vadd.xlane.f32.xlu0 %v1037
      %v1039 = vpop.xlane.xlu0 %1038
      %v1040 = vsel %vm318, %v1030, 0.0
      %1041 = vadd.xlane.f32.xlu0 %v1040
      %v1042 = vpop.xlane.xlu0 %1041
      %v1043 = vrcp.pop %v1033
      %v1044 = vrcp.pop %v1036
      %v1045 = vrcp.pop %v1039
      %v1046 = vrcp.pop %v1042
      %v1047 = vmul.f32 %v1024, %v1043
      %v1048 = vmul.f32 %v1026, %v1044
      %v1049 = vmul.f32 %v1028, %v1045
      %v1050 = vmul.f32 %v1030, %v1046
      %1051 = vrot.lane.b32.xlu0 %v737, 29
      %v1052 = vpop.permute.xlu0 %1051
      %1053 = vrot.lane.b32.xlu0 %v740, 29
      %v1054 = vpop.permute.xlu0 %1053
      %1055 = vrot.lane.b32.xlu0 %v743, 29
      %v1056 = vpop.permute.xlu0 %1055
      %1057 = vrot.lane.b32.xlu0 %v746, 29
      %v1058 = vpop.permute.xlu0 %1057
      %v1064 = vsel %vm318, %v1047, 0
      %v1067 = vsel %vm318, %v1048, 0
      %v1070 = vsel %vm318, %v1049, 0
      %v1073 = vsel %vm318, %v1050, 0
      %1075 = vmatpush.msra.mxu0 0.0
      %1076 = vmatpush.msra.mxu0 0.0
      %1077 = vmatpush.msra.mxu0 0.0
      %1078 = vmatpush.msra.mxu0 0.0
      %1079 = vmatpush.msra.mxu0 0.0
      %1080 = vmatpush.msra.mxu0 0.0
      %1081 = vmatpush.msra.mxu0 0.0
      %1082 = vmatpush.msra.mxu0 0.0
      %1083 = vmatpush.msra.mxu0 0.0
      %1084 = vmatpush.msra.mxu0 0.0
      %1085 = vmatpush.msra.mxu0 0.0
      %1086 = vmatpush.msra.mxu0 0.0
      %1087 = vmatpush.msra.mxu0 %v1058
      %1088 = vmatpush.msra.mxu0 %v1056
      %1089 = vmatpush.msra.mxu0 %v1054
      %1090 = vmatpush.msra.mxu0 %v1052
      %1091 = vmatmul.f32.gmra.mxu0 %v1064
      %v1092 = vpop.f32.mrf.mxu0
      %v1093 = vadd.f32 0.0, %v1092
      %1094 = vmatmul.f32.gmra.mxu0 %v1067
      %v1095 = vpop.f32.mrf.mxu0
      %v1096 = vadd.f32 0.0, %v1095
      %1097 = vmatmul.f32.gmra.mxu0 %v1070
      %v1098 = vpop.f32.mrf.mxu0
      %v1099 = vadd.f32 0.0, %v1098
      %1100 = vmatmul.f32.gmra.mxu0 %v1073
      %v1101 = vpop.f32.mrf.mxu0
      %v1102 = vadd.f32 0.0, %v1101
      %1103 = vdwg.mxu0
      %1110 = vrot.lane.b32.xlu0 %v777, 119
      %v1111 = vpop.permute.xlu0 %1110
      %1112 = vrot.lane.b32.xlu0 %v778, 119
      %v1113 = vpop.permute.xlu0 %1112
      %1114 = vrot.lane.b32.xlu0 %v779, 119
      %v1115 = vpop.permute.xlu0 %1114
      %1116 = vrot.lane.b32.xlu0 %v780, 119
      %v1117 = vpop.permute.xlu0 %1116
      %1118 = vrot.lane.b32.xlu0 %v781, 119
      %v1119 = vpop.permute.xlu0 %1118
      %1120 = vrot.lane.b32.xlu0 %v782, 119
      %v1121 = vpop.permute.xlu0 %1120
      %v1122 = vsel %vm795, %v1111, 0
      %v1124 = vsel %vm795, %v1113, 0
      %v1126 = vsel %vm795, %v1115, 0
      %v1128 = vsel %vm795, %v1117, 0
      %v1130 = vsel %vm795, %v1119, 0
      %v1132 = vsel %vm795, %v1121, 0
      %v1135 = vsel %vm795, %v1093, 0
      %v1138 = vsel %vm795, %v1096, 0
      %v1141 = vsel %vm795, %v1099, 0
      %v1144 = vsel %vm795, %v1102, 0
      %1146 = vmatpush.xpose.msra.mxu0 0.0
      %1147 = vmatpush.xpose.msra.mxu0 0.0
      %1148 = vmatpush.xpose.msra.mxu0 0.0
      %1149 = vmatpush.xpose.msra.mxu0 0.0
      %1150 = vmatpush.xpose.msra.mxu0 0.0
      %1151 = vmatpush.xpose.msra.mxu0 0.0
      %1152 = vmatpush.xpose.msra.mxu0 0.0
      %1153 = vmatpush.xpose.msra.mxu0 0.0
      %1154 = vmatpush.xpose.msra.mxu0 0.0
      %1155 = vmatpush.xpose.msra.mxu0 0.0
      %1156 = vmatpush.xpose.msra.mxu0 0.0
      %1157 = vmatpush.xpose.msra.mxu0 0.0
      %1158 = vmatpush.xpose.msra.mxu0 %v1144
      %1159 = vmatpush.xpose.msra.mxu0 %v1141
      %1160 = vmatpush.xpose.msra.mxu0 %v1138
      %1161 = vmatpush.xpose.msra.mxu0 %v1135
      %1162 = vmatmul.f32.gmra.mxu0 %v1122
      %v1163 = vpop.f32.mrf.mxu0
      %v1164 = vadd.f32 0.0, %v1163
      %1165 = vmatmul.f32.gmra.mxu0 %v1124
      %v1166 = vpop.f32.mrf.mxu0
      %v1167 = vadd.f32 0.0, %v1166
      %1168 = vmatmul.f32.gmra.mxu0 %v1126
      %v1169 = vpop.f32.mrf.mxu0
      %v1170 = vadd.f32 0.0, %v1169
      %1171 = vmatmul.f32.gmra.mxu0 %v1128
      %v1172 = vpop.f32.mrf.mxu0
      %v1173 = vadd.f32 0.0, %v1172
      %1174 = vmatmul.f32.gmra.mxu0 %v1130
      %v1175 = vpop.f32.mrf.mxu0
      %v1176 = vadd.f32 0.0, %v1175
      %1177 = vmatmul.f32.gmra.mxu0 %v1132
      %v1178 = vpop.f32.mrf.mxu0
      %v1179 = vadd.f32 0.0, %v1178
      %1180 = vdwg.mxu0
      %v1181 = vsel %vm795, %v777, 0
      %v1183 = vsel %vm795, %v778, 0
      %v1185 = vsel %vm795, %v779, 0
      %v1187 = vsel %vm795, %v780, 0
      %v1189 = vsel %vm795, %v781, 0
      %v1191 = vsel %vm795, %v782, 0
      %v1194 = vsel %vm795, %v931, 0
      %v1197 = vsel %vm795, %v934, 0
      %v1200 = vsel %vm795, %v937, 0
      %v1203 = vsel %vm795, %v940, 0
      %1205 = vmatpush.xpose.msra.mxu0 0.0
      %1206 = vmatpush.xpose.msra.mxu0 0.0
      %1207 = vmatpush.xpose.msra.mxu0 0.0
      %1208 = vmatpush.xpose.msra.mxu0 0.0
      %1209 = vmatpush.xpose.msra.mxu0 0.0
      %1210 = vmatpush.xpose.msra.mxu0 0.0
      %1211 = vmatpush.xpose.msra.mxu0 0.0
      %1212 = vmatpush.xpose.msra.mxu0 0.0
      %1213 = vmatpush.xpose.msra.mxu0 0.0
      %1214 = vmatpush.xpose.msra.mxu0 0.0
      %1215 = vmatpush.xpose.msra.mxu0 0.0
      %1216 = vmatpush.xpose.msra.mxu0 0.0
      %1217 = vmatpush.xpose.msra.mxu0 %v1203
      %1218 = vmatpush.xpose.msra.mxu0 %v1200
      %1219 = vmatpush.xpose.msra.mxu0 %v1197
      %1220 = vmatpush.xpose.msra.mxu0 %v1194
      %1221 = vmatmul.f32.gmra.mxu0 %v1181
      %v1222 = vpop.f32.mrf.mxu0
      %v1223 = vadd.f32 %v1164, %v1222
      %1224 = vmatmul.f32.gmra.mxu0 %v1183
      %v1225 = vpop.f32.mrf.mxu0
      %v1226 = vadd.f32 %v1167, %v1225
      %1227 = vmatmul.f32.gmra.mxu0 %v1185
      %v1228 = vpop.f32.mrf.mxu0
      %v1229 = vadd.f32 %v1170, %v1228
      %1230 = vmatmul.f32.gmra.mxu0 %v1187
      %v1231 = vpop.f32.mrf.mxu0
      %v1232 = vadd.f32 %v1173, %v1231
      %1233 = vmatmul.f32.gmra.mxu0 %v1189
      %v1234 = vpop.f32.mrf.mxu0
      %v1235 = vadd.f32 %v1176, %v1234
      %1236 = vmatmul.f32.gmra.mxu0 %v1191
      %v1237 = vpop.f32.mrf.mxu0
      %v1238 = vadd.f32 %v1179, %v1237
      %1239 = vdwg.mxu0
      %1240 = vrot.lane.b32.xlu0 %v737, 110
      %v1241 = vpop.permute.xlu0 %1240
      %1242 = vrot.lane.b32.xlu0 %v740, 110
      %v1243 = vpop.permute.xlu0 %1242
      %1244 = vrot.lane.b32.xlu0 %v743, 110
      %v1245 = vpop.permute.xlu0 %1244
      %1246 = vrot.lane.b32.xlu0 %v746, 110
      %v1247 = vpop.permute.xlu0 %1246
      %1248 = vrot.lane.b32.xlu0 %v737, 65
      %v1249 = vpop.permute.xlu0 %1248
      %1250 = vrot.lane.b32.xlu0 %v740, 65
      %v1251 = vpop.permute.xlu0 %1250
      %1252 = vrot.lane.b32.xlu0 %v743, 65
      %v1253 = vpop.permute.xlu0 %1252
      %1254 = vrot.lane.b32.xlu0 %v746, 65
      %v1255 = vpop.permute.xlu0 %1254
      %v1256 = vsel %vm795, %v1241, 0
      %v1258 = vsel %vm795, %v1243, 0
      %v1260 = vsel %vm795, %v1245, 0
      %v1262 = vsel %vm795, %v1247, 0
      %v1264 = vsel %vm795, %v1249, 0
      %v1266 = vsel %vm795, %v1251, 0
      %v1268 = vsel %vm795, %v1253, 0
      %v1270 = vsel %vm795, %v1255, 0
      %1272 = vmatpush.xpose.msra.mxu0 0.0
      %1273 = vmatpush.xpose.msra.mxu0 0.0
      %1274 = vmatpush.xpose.msra.mxu0 0.0
      %1275 = vmatpush.xpose.msra.mxu0 0.0
      %1276 = vmatpush.xpose.msra.mxu0 0.0
      %1277 = vmatpush.xpose.msra.mxu0 0.0
      %1278 = vmatpush.xpose.msra.mxu0 0.0
      %1279 = vmatpush.xpose.msra.mxu0 0.0
      %1280 = vmatpush.xpose.msra.mxu0 0.0
      %1281 = vmatpush.xpose.msra.mxu0 0.0
      %1282 = vmatpush.xpose.msra.mxu0 0.0
      %1283 = vmatpush.xpose.msra.mxu0 0.0
      %1284 = vmatpush.xpose.msra.mxu0 %v1270
      %1285 = vmatpush.xpose.msra.mxu0 %v1268
      %1286 = vmatpush.xpose.msra.mxu0 %v1266
      %1287 = vmatpush.xpose.msra.mxu0 %v1264
      %1288 = vmatmul.f32.gmra.mxu0 %v1256
      %v1289 = vpop.f32.mrf.mxu0
      %v1290 = vadd.f32 0.0, %v1289
      %1291 = vmatmul.f32.gmra.mxu0 %v1258
      %v1292 = vpop.f32.mrf.mxu0
      %v1293 = vadd.f32 0.0, %v1292
      %1294 = vmatmul.f32.gmra.mxu0 %v1260
      %v1295 = vpop.f32.mrf.mxu0
      %v1296 = vadd.f32 0.0, %v1295
      %1297 = vmatmul.f32.gmra.mxu0 %v1262
      %v1298 = vpop.f32.mrf.mxu0
      %v1299 = vadd.f32 0.0, %v1298
      %1300 = vdwg.mxu0
      %v1301 = vmul.f32 %v1290, 0.33333334
      %v1302 = vmul.f32 %v1293, 0.33333334
      %v1303 = vmul.f32 %v1296, 0.33333334
      %v1304 = vmul.f32 %v1299, 0.33333334
      %v1305 = vsel %vm318, %v1301, -inf
      %1306 = vmax.xlane.f32.xlu0 %v1305
      %v1307 = vpop.xlane.xlu0 %1306
      %v1308 = vsel %vm318, %v1302, -inf
      %1309 = vmax.xlane.f32.xlu0 %v1308
      %v1310 = vpop.xlane.xlu0 %1309
      %v1311 = vsel %vm318, %v1303, -inf
      %1312 = vmax.xlane.f32.xlu0 %v1311
      %v1313 = vpop.xlane.xlu0 %1312
      %v1314 = vsel %vm318, %v1304, -inf
      %1315 = vmax.xlane.f32.xlu0 %v1314
      %v1316 = vpop.xlane.xlu0 %1315
      %v1317 = vsub.f32 %v1301, %v1307
      %v1318 = vsub.f32 %v1302, %v1310
      %v1319 = vsub.f32 %v1303, %v1313
      %v1320 = vsub.f32 %v1304, %v1316
      %v1321 = vmul.f32 %v1317, 1.442695
      %v1322 = vpow.pop %v1321
      %v1323 = vmul.f32 %v1318, 1.442695
      %v1324 = vpow.pop %v1323
      %v1325 = vmul.f32 %v1319, 1.442695
      %v1326 = vpow.pop %v1325
      %v1327 = vmul.f32 %v1320, 1.442695
      %v1328 = vpow.pop %v1327
      %v1329 = vsel %vm318, %v1322, 0.0
      %1330 = vadd.xlane.f32.xlu0 %v1329
      %v1331 = vpop.xlane.xlu0 %1330
      %v1332 = vsel %vm318, %v1324, 0.0
      %1333 = vadd.xlane.f32.xlu0 %v1332
      %v1334 = vpop.xlane.xlu0 %1333
      %v1335 = vsel %vm318, %v1326, 0.0
      %1336 = vadd.xlane.f32.xlu0 %v1335
      %v1337 = vpop.xlane.xlu0 %1336
      %v1338 = vsel %vm318, %v1328, 0.0
      %1339 = vadd.xlane.f32.xlu0 %v1338
      %v1340 = vpop.xlane.xlu0 %1339
      %v1341 = vrcp.pop %v1331
      %v1342 = vrcp.pop %v1334
      %v1343 = vrcp.pop %v1337
      %v1344 = vrcp.pop %v1340
      %v1345 = vmul.f32 %v1322, %v1341
      %v1346 = vmul.f32 %v1324, %v1342
      %v1347 = vmul.f32 %v1326, %v1343
      %v1348 = vmul.f32 %v1328, %v1344
      %1349 = vrot.lane.b32.xlu0 %v737, 20
      %v1350 = vpop.permute.xlu0 %1349
      %1351 = vrot.lane.b32.xlu0 %v740, 20
      %v1352 = vpop.permute.xlu0 %1351
      %1353 = vrot.lane.b32.xlu0 %v743, 20
      %v1354 = vpop.permute.xlu0 %1353
      %1355 = vrot.lane.b32.xlu0 %v746, 20
      %v1356 = vpop.permute.xlu0 %1355
      %v1362 = vsel %vm318, %v1345, 0
      %v1365 = vsel %vm318, %v1346, 0
      %v1368 = vsel %vm318, %v1347, 0
      %v1371 = vsel %vm318, %v1348, 0
      %1373 = vmatpush.msra.mxu0 0.0
      %1374 = vmatpush.msra.mxu0 0.0
      %1375 = vmatpush.msra.mxu0 0.0
      %1376 = vmatpush.msra.mxu0 0.0
      %1377 = vmatpush.msra.mxu0 0.0
      %1378 = vmatpush.msra.mxu0 0.0
      %1379 = vmatpush.msra.mxu0 0.0
      %1380 = vmatpush.msra.mxu0 0.0
      %1381 = vmatpush.msra.mxu0 0.0
      %1382 = vmatpush.msra.mxu0 0.0
      %1383 = vmatpush.msra.mxu0 0.0
      %1384 = vmatpush.msra.mxu0 0.0
      %1385 = vmatpush.msra.mxu0 %v1356
      %1386 = vmatpush.msra.mxu0 %v1354
      %1387 = vmatpush.msra.mxu0 %v1352
      %1388 = vmatpush.msra.mxu0 %v1350
      %1389 = vmatmul.f32.gmra.mxu0 %v1362
      %v1390 = vpop.f32.mrf.mxu0
      %v1391 = vadd.f32 0.0, %v1390
      %1392 = vmatmul.f32.gmra.mxu0 %v1365
      %v1393 = vpop.f32.mrf.mxu0
      %v1394 = vadd.f32 0.0, %v1393
      %1395 = vmatmul.f32.gmra.mxu0 %v1368
      %v1396 = vpop.f32.mrf.mxu0
      %v1397 = vadd.f32 0.0, %v1396
      %1398 = vmatmul.f32.gmra.mxu0 %v1371
      %v1399 = vpop.f32.mrf.mxu0
      %v1400 = vadd.f32 0.0, %v1399
      %1401 = vdwg.mxu0
      %1402 = vrot.lane.b32.xlu0 %v777, 110
      %v1403 = vpop.permute.xlu0 %1402
      %1404 = vrot.lane.b32.xlu0 %v778, 110
      %v1405 = vpop.permute.xlu0 %1404
      %1406 = vrot.lane.b32.xlu0 %v779, 110
      %v1407 = vpop.permute.xlu0 %1406
      %1408 = vrot.lane.b32.xlu0 %v780, 110
      %v1409 = vpop.permute.xlu0 %1408
      %1410 = vrot.lane.b32.xlu0 %v781, 110
      %v1411 = vpop.permute.xlu0 %1410
      %1412 = vrot.lane.b32.xlu0 %v782, 110
      %v1413 = vpop.permute.xlu0 %1412
      %v1414 = vsel %vm795, %v1403, 0
      %v1416 = vsel %vm795, %v1405, 0
      %v1418 = vsel %vm795, %v1407, 0
      %v1420 = vsel %vm795, %v1409, 0
      %v1422 = vsel %vm795, %v1411, 0
      %v1424 = vsel %vm795, %v1413, 0
      %v1427 = vsel %vm795, %v1391, 0
      %v1430 = vsel %vm795, %v1394, 0
      %v1433 = vsel %vm795, %v1397, 0
      %v1436 = vsel %vm795, %v1400, 0
      %1438 = vmatpush.xpose.msra.mxu0 0.0
      %1439 = vmatpush.xpose.msra.mxu0 0.0
      %1440 = vmatpush.xpose.msra.mxu0 0.0
      %1441 = vmatpush.xpose.msra.mxu0 0.0
      %1442 = vmatpush.xpose.msra.mxu0 0.0
      %1443 = vmatpush.xpose.msra.mxu0 0.0
      %1444 = vmatpush.xpose.msra.mxu0 0.0
      %1445 = vmatpush.xpose.msra.mxu0 0.0
      %1446 = vmatpush.xpose.msra.mxu0 0.0
      %1447 = vmatpush.xpose.msra.mxu0 0.0
      %1448 = vmatpush.xpose.msra.mxu0 0.0
      %1449 = vmatpush.xpose.msra.mxu0 0.0
      %1450 = vmatpush.xpose.msra.mxu0 %v1436
      %1451 = vmatpush.xpose.msra.mxu0 %v1433
      %1452 = vmatpush.xpose.msra.mxu0 %v1430
      %1453 = vmatpush.xpose.msra.mxu0 %v1427
      %1454 = vmatmul.f32.gmra.mxu0 %v1414
      %v1455 = vpop.f32.mrf.mxu0
      %v1456 = vadd.f32 0.0, %v1455
      %1457 = vmatmul.f32.gmra.mxu0 %v1416
      %v1458 = vpop.f32.mrf.mxu0
      %v1459 = vadd.f32 0.0, %v1458
      %1460 = vmatmul.f32.gmra.mxu0 %v1418
      %v1461 = vpop.f32.mrf.mxu0
      %v1462 = vadd.f32 0.0, %v1461
      %1463 = vmatmul.f32.gmra.mxu0 %v1420
      %v1464 = vpop.f32.mrf.mxu0
      %v1465 = vadd.f32 0.0, %v1464
      %1466 = vmatmul.f32.gmra.mxu0 %v1422
      %v1467 = vpop.f32.mrf.mxu0
      %v1468 = vadd.f32 0.0, %v1467
      %1469 = vmatmul.f32.gmra.mxu0 %v1424
      %v1470 = vpop.f32.mrf.mxu0
      %v1471 = vadd.f32 0.0, %v1470
      %1472 = vdwg.mxu0
      %v1473 = vadd.f32 %v1223, %v1456
      %v1474 = vadd.f32 %v1226, %v1459
      %v1475 = vadd.f32 %v1229, %v1462
      %v1476 = vadd.f32 %v1232, %v1465
      %v1477 = vadd.f32 %v1235, %v1468
      %v1478 = vadd.f32 %v1238, %v1471
      %1479 = vrot.lane.b32.xlu0 %v737, 101
      %v1480 = vpop.permute.xlu0 %1479
      %1481 = vrot.lane.b32.xlu0 %v740, 101
      %v1482 = vpop.permute.xlu0 %1481
      %1483 = vrot.lane.b32.xlu0 %v743, 101
      %v1484 = vpop.permute.xlu0 %1483
      %1485 = vrot.lane.b32.xlu0 %v746, 101
      %v1486 = vpop.permute.xlu0 %1485
      %1487 = vrot.lane.b32.xlu0 %v737, 56
      %v1488 = vpop.permute.xlu0 %1487
      %1489 = vrot.lane.b32.xlu0 %v740, 56
      %v1490 = vpop.permute.xlu0 %1489
      %1491 = vrot.lane.b32.xlu0 %v743, 56
      %v1492 = vpop.permute.xlu0 %1491
      %1493 = vrot.lane.b32.xlu0 %v746, 56
      %v1494 = vpop.permute.xlu0 %1493
      %v1495 = vsel %vm795, %v1480, 0
      %v1497 = vsel %vm795, %v1482, 0
      %v1499 = vsel %vm795, %v1484, 0
      %v1501 = vsel %vm795, %v1486, 0
      %v1503 = vsel %vm795, %v1488, 0
      %v1505 = vsel %vm795, %v1490, 0
      %v1507 = vsel %vm795, %v1492, 0
      %v1509 = vsel %vm795, %v1494, 0
      %1511 = vmatpush.xpose.msra.mxu0 0.0
      %1512 = vmatpush.xpose.msra.mxu0 0.0
      %1513 = vmatpush.xpose.msra.mxu0 0.0
      %1514 = vmatpush.xpose.msra.mxu0 0.0
      %1515 = vmatpush.xpose.msra.mxu0 0.0
      %1516 = vmatpush.xpose.msra.mxu0 0.0
      %1517 = vmatpush.xpose.msra.mxu0 0.0
      %1518 = vmatpush.xpose.msra.mxu0 0.0
      %1519 = vmatpush.xpose.msra.mxu0 0.0
      %1520 = vmatpush.xpose.msra.mxu0 0.0
      %1521 = vmatpush.xpose.msra.mxu0 0.0
      %1522 = vmatpush.xpose.msra.mxu0 0.0
      %1523 = vmatpush.xpose.msra.mxu0 %v1509
      %1524 = vmatpush.xpose.msra.mxu0 %v1507
      %1525 = vmatpush.xpose.msra.mxu0 %v1505
      %1526 = vmatpush.xpose.msra.mxu0 %v1503
      %1527 = vmatmul.f32.gmra.mxu0 %v1495
      %v1528 = vpop.f32.mrf.mxu0
      %v1529 = vadd.f32 0.0, %v1528
      %1530 = vmatmul.f32.gmra.mxu0 %v1497
      %v1531 = vpop.f32.mrf.mxu0
      %v1532 = vadd.f32 0.0, %v1531
      %1533 = vmatmul.f32.gmra.mxu0 %v1499
      %v1534 = vpop.f32.mrf.mxu0
      %v1535 = vadd.f32 0.0, %v1534
      %1536 = vmatmul.f32.gmra.mxu0 %v1501
      %v1537 = vpop.f32.mrf.mxu0
      %v1538 = vadd.f32 0.0, %v1537
      %1539 = vdwg.mxu0
      %v1540 = vmul.f32 %v1529, 0.33333334
      %v1541 = vmul.f32 %v1532, 0.33333334
      %v1542 = vmul.f32 %v1535, 0.33333334
      %v1543 = vmul.f32 %v1538, 0.33333334
      %v1544 = vsel %vm318, %v1540, -inf
      %1545 = vmax.xlane.f32.xlu0 %v1544
      %v1546 = vpop.xlane.xlu0 %1545
      %v1547 = vsel %vm318, %v1541, -inf
      %1548 = vmax.xlane.f32.xlu0 %v1547
      %v1549 = vpop.xlane.xlu0 %1548
      %v1550 = vsel %vm318, %v1542, -inf
      %1551 = vmax.xlane.f32.xlu0 %v1550
      %v1552 = vpop.xlane.xlu0 %1551
      %v1553 = vsel %vm318, %v1543, -inf
      %1554 = vmax.xlane.f32.xlu0 %v1553
      %v1555 = vpop.xlane.xlu0 %1554
      %v1556 = vsub.f32 %v1540, %v1546
      %v1557 = vsub.f32 %v1541, %v1549
      %v1558 = vsub.f32 %v1542, %v1552
      %v1559 = vsub.f32 %v1543, %v1555
      %v1560 = vmul.f32 %v1556, 1.442695
      %v1561 = vpow.pop %v1560
      %v1562 = vmul.f32 %v1557, 1.442695
      %v1563 = vpow.pop %v1562
      %v1564 = vmul.f32 %v1558, 1.442695
      %v1565 = vpow.pop %v1564
      %v1566 = vmul.f32 %v1559, 1.442695
      %v1567 = vpow.pop %v1566
      %v1568 = vsel %vm318, %v1561, 0.0
      %1569 = vadd.xlane.f32.xlu0 %v1568
      %v1570 = vpop.xlane.xlu0 %1569
      %v1571 = vsel %vm318, %v1563, 0.0
      %1572 = vadd.xlane.f32.xlu0 %v1571
      %v1573 = vpop.xlane.xlu0 %1572
      %v1574 = vsel %vm318, %v1565, 0.0
      %1575 = vadd.xlane.f32.xlu0 %v1574
      %v1576 = vpop.xlane.xlu0 %1575
      %v1577 = vsel %vm318, %v1567, 0.0
      %1578 = vadd.xlane.f32.xlu0 %v1577
      %v1579 = vpop.xlane.xlu0 %1578
      %v1580 = vrcp.pop %v1570
      %v1581 = vrcp.pop %v1573
      %v1582 = vrcp.pop %v1576
      %v1583 = vrcp.pop %v1579
      %v1584 = vmul.f32 %v1561, %v1580
      %v1585 = vmul.f32 %v1563, %v1581
      %v1586 = vmul.f32 %v1565, %v1582
      %v1587 = vmul.f32 %v1567, %v1583
      %1588 = vrot.lane.b32.xlu0 %v737, 11
      %v1589 = vpop.permute.xlu0 %1588
      %1590 = vrot.lane.b32.xlu0 %v740, 11
      %v1591 = vpop.permute.xlu0 %1590
      %1592 = vrot.lane.b32.xlu0 %v743, 11
      %v1593 = vpop.permute.xlu0 %1592
      %1594 = vrot.lane.b32.xlu0 %v746, 11
      %v1595 = vpop.permute.xlu0 %1594
      %v1601 = vsel %vm318, %v1584, 0
      %v1604 = vsel %vm318, %v1585, 0
      %v1607 = vsel %vm318, %v1586, 0
      %v1610 = vsel %vm318, %v1587, 0
      %1612 = vmatpush.msra.mxu0 0.0
      %1613 = vmatpush.msra.mxu0 0.0
      %1614 = vmatpush.msra.mxu0 0.0
      %1615 = vmatpush.msra.mxu0 0.0
      %1616 = vmatpush.msra.mxu0 0.0
      %1617 = vmatpush.msra.mxu0 0.0
      %1618 = vmatpush.msra.mxu0 0.0
      %1619 = vmatpush.msra.mxu0 0.0
      %1620 = vmatpush.msra.mxu0 0.0
      %1621 = vmatpush.msra.mxu0 0.0
      %1622 = vmatpush.msra.mxu0 0.0
      %1623 = vmatpush.msra.mxu0 0.0
      %1624 = vmatpush.msra.mxu0 %v1595
      %1625 = vmatpush.msra.mxu0 %v1593
      %1626 = vmatpush.msra.mxu0 %v1591
      %1627 = vmatpush.msra.mxu0 %v1589
      %1628 = vmatmul.f32.gmra.mxu0 %v1601
      %v1629 = vpop.f32.mrf.mxu0
      %v1630 = vadd.f32 0.0, %v1629
      %1631 = vmatmul.f32.gmra.mxu0 %v1604
      %v1632 = vpop.f32.mrf.mxu0
      %v1633 = vadd.f32 0.0, %v1632
      %1634 = vmatmul.f32.gmra.mxu0 %v1607
      %v1635 = vpop.f32.mrf.mxu0
      %v1636 = vadd.f32 0.0, %v1635
      %1637 = vmatmul.f32.gmra.mxu0 %v1610
      %v1638 = vpop.f32.mrf.mxu0
      %v1639 = vadd.f32 0.0, %v1638
      %1640 = vdwg.mxu0
      %1641 = vrot.lane.b32.xlu0 %v777, 101
      %v1642 = vpop.permute.xlu0 %1641
      %1643 = vrot.lane.b32.xlu0 %v778, 101
      %v1644 = vpop.permute.xlu0 %1643
      %1645 = vrot.lane.b32.xlu0 %v779, 101
      %v1646 = vpop.permute.xlu0 %1645
      %1647 = vrot.lane.b32.xlu0 %v780, 101
      %v1648 = vpop.permute.xlu0 %1647
      %1649 = vrot.lane.b32.xlu0 %v781, 101
      %v1650 = vpop.permute.xlu0 %1649
      %1651 = vrot.lane.b32.xlu0 %v782, 101
      %v1652 = vpop.permute.xlu0 %1651
      %v1653 = vsel %vm795, %v1642, 0
      %v1655 = vsel %vm795, %v1644, 0
      %v1657 = vsel %vm795, %v1646, 0
      %v1659 = vsel %vm795, %v1648, 0
      %v1661 = vsel %vm795, %v1650, 0
      %v1663 = vsel %vm795, %v1652, 0
      %v1666 = vsel %vm795, %v1630, 0
      %v1669 = vsel %vm795, %v1633, 0
      %v1672 = vsel %vm795, %v1636, 0
      %v1675 = vsel %vm795, %v1639, 0
      %1677 = vmatpush.xpose.msra.mxu0 0.0
      %1678 = vmatpush.xpose.msra.mxu0 0.0
      %1679 = vmatpush.xpose.msra.mxu0 0.0
      %1680 = vmatpush.xpose.msra.mxu0 0.0
      %1681 = vmatpush.xpose.msra.mxu0 0.0
      %1682 = vmatpush.xpose.msra.mxu0 0.0
      %1683 = vmatpush.xpose.msra.mxu0 0.0
      %1684 = vmatpush.xpose.msra.mxu0 0.0
      %1685 = vmatpush.xpose.msra.mxu0 0.0
      %1686 = vmatpush.xpose.msra.mxu0 0.0
      %1687 = vmatpush.xpose.msra.mxu0 0.0
      %1688 = vmatpush.xpose.msra.mxu0 0.0
      %1689 = vmatpush.xpose.msra.mxu0 %v1675
      %1690 = vmatpush.xpose.msra.mxu0 %v1672
      %1691 = vmatpush.xpose.msra.mxu0 %v1669
      %1692 = vmatpush.xpose.msra.mxu0 %v1666
      %1693 = vmatmul.f32.gmra.mxu0 %v1653
      %v1694 = vpop.f32.mrf.mxu0
      %v1695 = vadd.f32 0.0, %v1694
      %1696 = vmatmul.f32.gmra.mxu0 %v1655
      %v1697 = vpop.f32.mrf.mxu0
      %v1698 = vadd.f32 0.0, %v1697
      %1699 = vmatmul.f32.gmra.mxu0 %v1657
      %v1700 = vpop.f32.mrf.mxu0
      %v1701 = vadd.f32 0.0, %v1700
      %1702 = vmatmul.f32.gmra.mxu0 %v1659
      %v1703 = vpop.f32.mrf.mxu0
      %v1704 = vadd.f32 0.0, %v1703
      %1705 = vmatmul.f32.gmra.mxu0 %v1661
      %v1706 = vpop.f32.mrf.mxu0
      %v1707 = vadd.f32 0.0, %v1706
      %1708 = vmatmul.f32.gmra.mxu0 %v1663
      %v1709 = vpop.f32.mrf.mxu0
      %v1710 = vadd.f32 0.0, %v1709
      %1711 = vdwg.mxu0
      %v1712 = vadd.f32 %v1473, %v1695
      %v1713 = vadd.f32 %v1474, %v1698
      %v1714 = vadd.f32 %v1475, %v1701
      %v1715 = vadd.f32 %v1476, %v1704
      %v1716 = vadd.f32 %v1477, %v1707
      %v1717 = vadd.f32 %v1478, %v1710
      %1718 = vrot.lane.b32.xlu0 %v737, 92
      %v1719 = vpop.permute.xlu0 %1718
      %1720 = vrot.lane.b32.xlu0 %v740, 92
      %v1721 = vpop.permute.xlu0 %1720
      %1722 = vrot.lane.b32.xlu0 %v743, 92
      %v1723 = vpop.permute.xlu0 %1722
      %1724 = vrot.lane.b32.xlu0 %v746, 92
      %v1725 = vpop.permute.xlu0 %1724
      %1726 = vrot.lane.b32.xlu0 %v737, 47
      %v1727 = vpop.permute.xlu0 %1726
      %1728 = vrot.lane.b32.xlu0 %v740, 47
      %v1729 = vpop.permute.xlu0 %1728
      %1730 = vrot.lane.b32.xlu0 %v743, 47
      %v1731 = vpop.permute.xlu0 %1730
      %1732 = vrot.lane.b32.xlu0 %v746, 47
      %v1733 = vpop.permute.xlu0 %1732
      %v1734 = vsel %vm795, %v1719, 0
      %v1736 = vsel %vm795, %v1721, 0
      %v1738 = vsel %vm795, %v1723, 0
      %v1740 = vsel %vm795, %v1725, 0
      %v1742 = vsel %vm795, %v1727, 0
      %v1744 = vsel %vm795, %v1729, 0
      %v1746 = vsel %vm795, %v1731, 0
      %v1748 = vsel %vm795, %v1733, 0
      %1750 = vmatpush.xpose.msra.mxu0 0.0
      %1751 = vmatpush.xpose.msra.mxu0 0.0
      %1752 = vmatpush.xpose.msra.mxu0 0.0
      %1753 = vmatpush.xpose.msra.mxu0 0.0
      %1754 = vmatpush.xpose.msra.mxu0 0.0
      %1755 = vmatpush.xpose.msra.mxu0 0.0
      %1756 = vmatpush.xpose.msra.mxu0 0.0
      %1757 = vmatpush.xpose.msra.mxu0 0.0
      %1758 = vmatpush.xpose.msra.mxu0 0.0
      %1759 = vmatpush.xpose.msra.mxu0 0.0
      %1760 = vmatpush.xpose.msra.mxu0 0.0
      %1761 = vmatpush.xpose.msra.mxu0 0.0
      %1762 = vmatpush.xpose.msra.mxu0 %v1748
      %1763 = vmatpush.xpose.msra.mxu0 %v1746
      %1764 = vmatpush.xpose.msra.mxu0 %v1744
      %1765 = vmatpush.xpose.msra.mxu0 %v1742
      %1766 = vmatmul.f32.gmra.mxu0 %v1734
      %v1767 = vpop.f32.mrf.mxu0
      %v1768 = vadd.f32 0.0, %v1767
      %1769 = vmatmul.f32.gmra.mxu0 %v1736
      %v1770 = vpop.f32.mrf.mxu0
      %v1771 = vadd.f32 0.0, %v1770
      %1772 = vmatmul.f32.gmra.mxu0 %v1738
      %v1773 = vpop.f32.mrf.mxu0
      %v1774 = vadd.f32 0.0, %v1773
      %1775 = vmatmul.f32.gmra.mxu0 %v1740
      %v1776 = vpop.f32.mrf.mxu0
      %v1777 = vadd.f32 0.0, %v1776
      %1778 = vdwg.mxu0
      %v1779 = vmul.f32 %v1768, 0.33333334
      %v1780 = vmul.f32 %v1771, 0.33333334
      %v1781 = vmul.f32 %v1774, 0.33333334
      %v1782 = vmul.f32 %v1777, 0.33333334
      %v1783 = vsel %vm318, %v1779, -inf
      %1784 = vmax.xlane.f32.xlu0 %v1783
      %v1785 = vpop.xlane.xlu0 %1784
      %v1786 = vsel %vm318, %v1780, -inf
      %1787 = vmax.xlane.f32.xlu0 %v1786
      %v1788 = vpop.xlane.xlu0 %1787
      %v1789 = vsel %vm318, %v1781, -inf
      %1790 = vmax.xlane.f32.xlu0 %v1789
      %v1791 = vpop.xlane.xlu0 %1790
      %v1792 = vsel %vm318, %v1782, -inf
      %1793 = vmax.xlane.f32.xlu0 %v1792
      %v1794 = vpop.xlane.xlu0 %1793
      %v1795 = vsub.f32 %v1779, %v1785
      %v1796 = vsub.f32 %v1780, %v1788
      %v1797 = vsub.f32 %v1781, %v1791
      %v1798 = vsub.f32 %v1782, %v1794
      %v1799 = vmul.f32 %v1795, 1.442695
      %v1800 = vpow.pop %v1799
      %v1801 = vmul.f32 %v1796, 1.442695
      %v1802 = vpow.pop %v1801
      %v1803 = vmul.f32 %v1797, 1.442695
      %v1804 = vpow.pop %v1803
      %v1805 = vmul.f32 %v1798, 1.442695
      %v1806 = vpow.pop %v1805
      %v1807 = vsel %vm318, %v1800, 0.0
      %1808 = vadd.xlane.f32.xlu0 %v1807
      %v1809 = vpop.xlane.xlu0 %1808
      %v1810 = vsel %vm318, %v1802, 0.0
      %1811 = vadd.xlane.f32.xlu0 %v1810
      %v1812 = vpop.xlane.xlu0 %1811
      %v1813 = vsel %vm318, %v1804, 0.0
      %1814 = vadd.xlane.f32.xlu0 %v1813
      %v1815 = vpop.xlane.xlu0 %1814
      %v1816 = vsel %vm318, %v1806, 0.0
      %1817 = vadd.xlane.f32.xlu0 %v1816
      %v1818 = vpop.xlane.xlu0 %1817
      %v1819 = vrcp.pop %v1809
      %v1820 = vrcp.pop %v1812
      %v1821 = vrcp.pop %v1815
      %v1822 = vrcp.pop %v1818
      %v1823 = vmul.f32 %v1800, %v1819
      %v1824 = vmul.f32 %v1802, %v1820
      %v1825 = vmul.f32 %v1804, %v1821
      %v1826 = vmul.f32 %v1806, %v1822
      %1831 = vrot.lane.b32.xlu0 %v737, 2
      %v1832 = vpop.permute.xlu0 %1831
      %1833 = vrot.lane.b32.xlu0 %v766, 2
      %v1834 = vpop.permute.xlu0 %1833
      %1835 = vrot.lane.b32.xlu0 %v740, 2
      %v1836 = vpop.permute.xlu0 %1835
      %1837 = vrot.lane.b32.xlu0 %v769, 2
      %v1838 = vpop.permute.xlu0 %1837
      %1839 = vrot.lane.b32.xlu0 %v743, 2
      %v1840 = vpop.permute.xlu0 %1839
      %1841 = vrot.lane.b32.xlu0 %v772, 2
      %v1842 = vpop.permute.xlu0 %1841
      %1843 = vrot.lane.b32.xlu0 %v746, 2
      %v1844 = vpop.permute.xlu0 %1843
      %1845 = vrot.lane.b32.xlu0 %v775, 2
      %v1846 = vpop.permute.xlu0 %1845
      %vm1847 = vcmask 15360
      %v1848 = vsel %vm1847, %v1832, %v1834
      %v1849 = vsel %vm1847, %v1836, %v1838
      %v1850 = vsel %vm1847, %v1840, %v1842
      %v1851 = vsel %vm1847, %v1844, %v1846
      %v1857 = vsel %vm318, %v1823, 0
      %v1860 = vsel %vm318, %v1824, 0
      %v1863 = vsel %vm318, %v1825, 0
      %v1866 = vsel %vm318, %v1826, 0
      %1868 = vmatpush.msra.mxu0 0.0
      %1869 = vmatpush.msra.mxu0 0.0
      %1870 = vmatpush.msra.mxu0 0.0
      %1871 = vmatpush.msra.mxu0 0.0
      %1872 = vmatpush.msra.mxu0 0.0
      %1873 = vmatpush.msra.mxu0 0.0
      %1874 = vmatpush.msra.mxu0 0.0
      %1875 = vmatpush.msra.mxu0 0.0
      %1876 = vmatpush.msra.mxu0 0.0
      %1877 = vmatpush.msra.mxu0 0.0
      %1878 = vmatpush.msra.mxu0 0.0
      %1879 = vmatpush.msra.mxu0 0.0
      %1880 = vmatpush.msra.mxu0 %v1851
      %1881 = vmatpush.msra.mxu0 %v1850
      %1882 = vmatpush.msra.mxu0 %v1849
      %1883 = vmatpush.msra.mxu0 %v1848
      %1884 = vmatmul.f32.gmra.mxu0 %v1857
      %v1885 = vpop.f32.mrf.mxu0
      %v1886 = vadd.f32 0.0, %v1885
      %1887 = vmatmul.f32.gmra.mxu0 %v1860
      %v1888 = vpop.f32.mrf.mxu0
      %v1889 = vadd.f32 0.0, %v1888
      %1890 = vmatmul.f32.gmra.mxu0 %v1863
      %v1891 = vpop.f32.mrf.mxu0
      %v1892 = vadd.f32 0.0, %v1891
      %1893 = vmatmul.f32.gmra.mxu0 %v1866
      %v1894 = vpop.f32.mrf.mxu0
      %v1895 = vadd.f32 0.0, %v1894
      %1896 = vdwg.mxu0
      %1897 = vrot.lane.b32.xlu0 %v777, 92
      %v1898 = vpop.permute.xlu0 %1897
      %1899 = vrot.lane.b32.xlu0 %v778, 92
      %v1900 = vpop.permute.xlu0 %1899
      %1901 = vrot.lane.b32.xlu0 %v779, 92
      %v1902 = vpop.permute.xlu0 %1901
      %1903 = vrot.lane.b32.xlu0 %v780, 92
      %v1904 = vpop.permute.xlu0 %1903
      %1905 = vrot.lane.b32.xlu0 %v781, 92
      %v1906 = vpop.permute.xlu0 %1905
      %1907 = vrot.lane.b32.xlu0 %v782, 92
      %v1908 = vpop.permute.xlu0 %1907
      %v1909 = vsel %vm795, %v1898, 0
      %v1911 = vsel %vm795, %v1900, 0
      %v1913 = vsel %vm795, %v1902, 0
      %v1915 = vsel %vm795, %v1904, 0
      %v1917 = vsel %vm795, %v1906, 0
      %v1919 = vsel %vm795, %v1908, 0
      %v1922 = vsel %vm795, %v1886, 0
      %v1925 = vsel %vm795, %v1889, 0
      %v1928 = vsel %vm795, %v1892, 0
      %v1931 = vsel %vm795, %v1895, 0
      %1933 = vmatpush.xpose.msra.mxu0 0.0
      %1934 = vmatpush.xpose.msra.mxu0 0.0
      %1935 = vmatpush.xpose.msra.mxu0 0.0
      %1936 = vmatpush.xpose.msra.mxu0 0.0
      %1937 = vmatpush.xpose.msra.mxu0 0.0
      %1938 = vmatpush.xpose.msra.mxu0 0.0
      %1939 = vmatpush.xpose.msra.mxu0 0.0
      %1940 = vmatpush.xpose.msra.mxu0 0.0
      %1941 = vmatpush.xpose.msra.mxu0 0.0
      %1942 = vmatpush.xpose.msra.mxu0 0.0
      %1943 = vmatpush.xpose.msra.mxu0 0.0
      %1944 = vmatpush.xpose.msra.mxu0 0.0
      %1945 = vmatpush.xpose.msra.mxu0 %v1931
      %1946 = vmatpush.xpose.msra.mxu0 %v1928
      %1947 = vmatpush.xpose.msra.mxu0 %v1925
      %1948 = vmatpush.xpose.msra.mxu0 %v1922
      %1949 = vmatmul.f32.gmra.mxu0 %v1909
      %v1950 = vpop.f32.mrf.mxu0
      %v1951 = vadd.f32 0.0, %v1950
      %1952 = vmatmul.f32.gmra.mxu0 %v1911
      %v1953 = vpop.f32.mrf.mxu0
      %v1954 = vadd.f32 0.0, %v1953
      %1955 = vmatmul.f32.gmra.mxu0 %v1913
      %v1956 = vpop.f32.mrf.mxu0
      %v1957 = vadd.f32 0.0, %v1956
      %1958 = vmatmul.f32.gmra.mxu0 %v1915
      %v1959 = vpop.f32.mrf.mxu0
      %v1960 = vadd.f32 0.0, %v1959
      %1961 = vmatmul.f32.gmra.mxu0 %v1917
      %v1962 = vpop.f32.mrf.mxu0
      %v1963 = vadd.f32 0.0, %v1962
      %1964 = vmatmul.f32.gmra.mxu0 %v1919
      %v1965 = vpop.f32.mrf.mxu0
      %v1966 = vadd.f32 0.0, %v1965
      %1967 = vdwg.mxu0
      %v1968 = vadd.f32 %v1712, %v1951
      %v1969 = vadd.f32 %v1713, %v1954
      %v1970 = vadd.f32 %v1714, %v1957
      %v1971 = vadd.f32 %v1715, %v1960
      %v1972 = vadd.f32 %v1716, %v1963
      %v1973 = vadd.f32 %v1717, %v1966
      %1974 = vset.pattern.permute.xlu0 45
      %1975 = vperm.xlu0 %1974, %v777
      %v1976 = vpop.permute.xlu0 %1975
      %1978 = vset.pattern.permute.xlu0 45
      %1979 = vperm.xlu0 %1978, %v778
      %v1980 = vpop.permute.xlu0 %1979
      %1982 = vset.pattern.permute.xlu0 45
      %1983 = vperm.xlu0 %1982, %v779
      %v1984 = vpop.permute.xlu0 %1983
      %1986 = vset.pattern.permute.xlu0 45
      %1987 = vperm.xlu0 %1986, %v780
      %v1988 = vpop.permute.xlu0 %1987
      %1990 = vset.pattern.permute.xlu0 45
      %1991 = vperm.xlu0 %1990, %v781
      %v1992 = vpop.permute.xlu0 %1991
      %1994 = vset.pattern.permute.xlu0 45
      %1995 = vperm.xlu0 %1994, %v782
      %v1996 = vpop.permute.xlu0 %1995
      %v1998 = vadd.f32 %v1968, %v1976
      %v1999 = vadd.f32 %v1969, %v1980
      %v2000 = vadd.f32 %v1970, %v1984
      %v2001 = vadd.f32 %v1971, %v1988
      %v2002 = vadd.f32 %v1972, %v1992
      %v2003 = vadd.f32 %v1973, %v1996
      %v2004 = vld [vmem:[%s7] sm:$0xf]
      %v2005 = vadd.f32 %v306, %v1998
      %v2006 = vadd.f32 %v307, %v1999
      %v2007 = vadd.f32 %v308, %v2000
      %v2008 = vadd.f32 %v309, %v2001
      %v2009 = vadd.f32 %v310, %v2002
      %v2010 = vadd.f32 %v311, %v2003
      %v2011 = vsel %vm318, %v2005, 0.0
      %2012 = vadd.xlane.f32.xlu0 %v2011
      %v2013 = vpop.xlane.xlu0 %2012
      %v2014 = vsel %vm318, %v2006, 0.0
      %2015 = vadd.xlane.f32.xlu0 %v2014
      %v2016 = vpop.xlane.xlu0 %2015
      %v2017 = vsel %vm318, %v2007, 0.0
      %2018 = vadd.xlane.f32.xlu0 %v2017
      %v2019 = vpop.xlane.xlu0 %2018
      %v2020 = vsel %vm318, %v2008, 0.0
      %2021 = vadd.xlane.f32.xlu0 %v2020
      %v2022 = vpop.xlane.xlu0 %2021
      %v2023 = vsel %vm318, %v2009, 0.0
      %2024 = vadd.xlane.f32.xlu0 %v2023
      %v2025 = vpop.xlane.xlu0 %2024
      %vm2026 = vcmask 258048
      %v2027 = vsel %vm2026, %v2010, 0.0
      %2028 = vadd.xlane.f32.xlu0 %v2027
      %v2029 = vpop.xlane.xlu0 %2028
      %v2030 = vrcp.pop 32.0
      %v2031 = vmul.f32 32.0, %v2030
      %v2032 = vsub.f32 1.0, %v2031
      %v2033 = vmul.f32 %v2030, %v2032
      %v2034 = vadd.f32 %v2030, %v2033
      %vm2035 = vweird.f32 %v2030
      %v2036 = vsel %vm2035, %v2030, %v2034
      %v2037 = vmul.f32 %v2013, %v2036
      %v2038 = vmul.f32 %v2016, %v2036
      %v2039 = vmul.f32 %v2019, %v2036
      %v2040 = vmul.f32 %v2022, %v2036
      %v2041 = vmul.f32 %v2025, %v2036
      %v2042 = vmul.f32 %v2029, %v2036
      %v2043 = vsub.f32 %v2005, %v2037
      %v2044 = vsub.f32 %v2006, %v2038
      %v2045 = vsub.f32 %v2007, %v2039
      %v2046 = vsub.f32 %v2008, %v2040
      %v2047 = vsub.f32 %v2009, %v2041
      %v2048 = vsub.f32 %v2010, %v2042
      %v2049 = vmul.f32 %v2043, %v2043
      %v2050 = vmul.f32 %v2044, %v2044
      %v2051 = vmul.f32 %v2045, %v2045
      %v2052 = vmul.f32 %v2046, %v2046
      %v2053 = vmul.f32 %v2047, %v2047
      %v2054 = vmul.f32 %v2048, %v2048
      %v2055 = vsel %vm318, %v2049, 0.0
      %2056 = vadd.xlane.f32.xlu0 %v2055
      %v2057 = vpop.xlane.xlu0 %2056
      %v2058 = vsel %vm318, %v2050, 0.0
      %2059 = vadd.xlane.f32.xlu0 %v2058
      %v2060 = vpop.xlane.xlu0 %2059
      %v2061 = vsel %vm318, %v2051, 0.0
      %2062 = vadd.xlane.f32.xlu0 %v2061
      %v2063 = vpop.xlane.xlu0 %2062
      %v2064 = vsel %vm318, %v2052, 0.0
      %2065 = vadd.xlane.f32.xlu0 %v2064
      %v2066 = vpop.xlane.xlu0 %2065
      %v2067 = vsel %vm318, %v2053, 0.0
      %2068 = vadd.xlane.f32.xlu0 %v2067
      %v2069 = vpop.xlane.xlu0 %2068
      %v2070 = vsel %vm2026, %v2054, 0.0
      %2071 = vadd.xlane.f32.xlu0 %v2070
      %v2072 = vpop.xlane.xlu0 %2071
      %v2073 = vmul.f32 %v2057, %v2036
      %v2074 = vmul.f32 %v2060, %v2036
      %v2075 = vmul.f32 %v2063, %v2036
      %v2076 = vmul.f32 %v2066, %v2036
      %v2077 = vmul.f32 %v2069, %v2036
      %v2078 = vmul.f32 %v2072, %v2036
      %v2079 = vadd.f32 %v2073, 1e-05
      %v2080 = vadd.f32 %v2074, 1e-05
      %v2081 = vadd.f32 %v2075, 1e-05
      %v2082 = vadd.f32 %v2076, 1e-05
      %v2083 = vadd.f32 %v2077, 1e-05
      %v2084 = vadd.f32 %v2078, 1e-05
      %v2085 = vrsqrt.pop %v2079
      %v2086 = vmul.f32 %v2085, %v2079
      %v2087 = vmul.f32 %v2086, %v2085
      %v2088 = vmul.f32 0.5, %v2087
      %v2089 = vsub.f32 1.5, %v2088
      %v2090 = vmul.f32 %v2085, %v2089
      %vm2091 = vweird.f32 %v2079
      %vm2092 = vweird.f32 %v2085
      %vm2093 = vmor %vm2091, %vm2092
      %v2094 = vsel %vm2093, %v2085, %v2090
      %v2095 = vrsqrt.pop %v2080
      %v2096 = vmul.f32 %v2095, %v2080
      %v2097 = vmul.f32 %v2096, %v2095
      %v2098 = vmul.f32 0.5, %v2097
      %v2099 = vsub.f32 1.5, %v2098
      %v2100 = vmul.f32 %v2095, %v2099
      %vm2101 = vweird.f32 %v2080
      %vm2102 = vweird.f32 %v2095
      %vm2103 = vmor %vm2101, %vm2102
      %v2104 = vsel %vm2103, %v2095, %v2100
      %v2105 = vrsqrt.pop %v2081
      %v2106 = vmul.f32 %v2105, %v2081
      %v2107 = vmul.f32 %v2106, %v2105
      %v2108 = vmul.f32 0.5, %v2107
      %v2109 = vsub.f32 1.5, %v2108
      %v2110 = vmul.f32 %v2105, %v2109
      %vm2111 = vweird.f32 %v2081
      %vm2112 = vweird.f32 %v2105
      %vm2113 = vmor %vm2111, %vm2112
      %v2114 = vsel %vm2113, %v2105, %v2110
      %v2115 = vrsqrt.pop %v2082
      %v2116 = vmul.f32 %v2115, %v2082
      %v2117 = vmul.f32 %v2116, %v2115
      %v2118 = vmul.f32 0.5, %v2117
      %v2119 = vsub.f32 1.5, %v2118
      %v2120 = vmul.f32 %v2115, %v2119
      %vm2121 = vweird.f32 %v2082
      %vm2122 = vweird.f32 %v2115
      %vm2123 = vmor %vm2121, %vm2122
      %v2124 = vsel %vm2123, %v2115, %v2120
      %v2125 = vrsqrt.pop %v2083
      %v2126 = vmul.f32 %v2125, %v2083
      %v2127 = vmul.f32 %v2126, %v2125
      %v2128 = vmul.f32 0.5, %v2127
      %v2129 = vsub.f32 1.5, %v2128
      %v2130 = vmul.f32 %v2125, %v2129
      %vm2131 = vweird.f32 %v2083
      %vm2132 = vweird.f32 %v2125
      %vm2133 = vmor %vm2131, %vm2132
      %v2134 = vsel %vm2133, %v2125, %v2130
      %v2135 = vrsqrt.pop %v2084
      %v2136 = vmul.f32 %v2135, %v2084
      %v2137 = vmul.f32 %v2136, %v2135
      %v2138 = vmul.f32 0.5, %v2137
      %v2139 = vsub.f32 1.5, %v2138
      %v2140 = vmul.f32 %v2135, %v2139
      %vm2141 = vweird.f32 %v2084
      %vm2142 = vweird.f32 %v2135
      %vm2143 = vmor %vm2141, %vm2142
      %v2144 = vsel %vm2143, %v2135, %v2140
      %v2145 = vmul.f32 %v2043, %v2094
      %v2146 = vmul.f32 %v2044, %v2104
      %v2147 = vmul.f32 %v2045, %v2114
      %v2148 = vmul.f32 %v2046, %v2124
      %v2149 = vmul.f32 %v2047, %v2134
      %v2150 = vmul.f32 %v2048, %v2144
      %v2151 = vperm.slane %v2004, 0
      %v2152 = vmul.f32 %v2145, %v2151
      %v2153 = vmul.f32 %v2146, %v2151
      %v2154 = vmul.f32 %v2147, %v2151
      %v2155 = vmul.f32 %v2148, %v2151
      %v2156 = vmul.f32 %v2149, %v2151
      %v2157 = vmul.f32 %v2150, %v2151
      %v2158 = vperm.slane %v2004, 1
      %v2159 = vadd.f32 %v2152, %v2158
      %v2160 = vadd.f32 %v2153, %v2158
      %v2161 = vadd.f32 %v2154, %v2158
      %v2162 = vadd.f32 %v2155, %v2158
      %v2163 = vadd.f32 %v2156, %v2158
      %v2164 = vadd.f32 %v2157, %v2158
      %v2165 = vld [vmem:[%s5] sm:$0xff]
      %v2166 = vld [vmem:[%s5 + $0x8] sm:$0xff]
      %v2167 = vld [vmem:[%s5 + $0x10] sm:$0xff]
      %v2168 = vld [vmem:[%s5 + $0x18] sm:$0xff]
      %v2169 = vld [vmem:[%s5 + $0x20] sm:$0x1]
      %v2170 = vperm.slane %v2169, 0
      %v2172 = vsel %vm318, %v2159, 0
      %v2175 = vsel %vm318, %v2160, 0
      %v2178 = vsel %vm318, %v2161, 0
      %v2181 = vsel %vm318, %v2162, 0
      %v2184 = vsel %vm318, %v2163, 0
      %v2187 = vsel %vm318, %v2164, 0
      %2189 = vmatpush.msra.mxu0 0.0
      %2190 = vmatpush.msra.mxu0 0.0
      %2191 = vmatpush.msra.mxu0 0.0
      %2192 = vmatpush.msra.mxu0 0.0
      %2193 = vmatpush.msra.mxu0 0.0
      %2194 = vmatpush.msra.mxu0 0.0
      %2195 = vmatpush.msra.mxu0 0.0
      %2196 = vmatpush.msra.mxu0 0.0
      %2197 = vmatpush.msra.mxu0 0.0
      %2198 = vmatpush.msra.mxu0 0.0
      %2199 = vmatpush.msra.mxu0 0.0
      %2200 = vmatpush.msra.mxu0 0.0
      %2201 = vmatpush.msra.mxu0 %v2168
      %2202 = vmatpush.msra.mxu0 %v2167
      %2203 = vmatpush.msra.mxu0 %v2166
      %2204 = vmatpush.msra.mxu0 %v2165
      %2205 = vmatmul.f32.gmra.mxu0 %v2172
      %v2206 = vpop.f32.mrf.mxu0
      %v2207 = vadd.f32 %v2170, %v2206
      %2208 = vmatmul.f32.gmra.mxu0 %v2175
      %v2209 = vpop.f32.mrf.mxu0
      %v2210 = vadd.f32 %v2170, %v2209
      %2211 = vmatmul.f32.gmra.mxu0 %v2178
      %v2212 = vpop.f32.mrf.mxu0
      %v2213 = vadd.f32 %v2170, %v2212
      %2214 = vmatmul.f32.gmra.mxu0 %v2181
      %v2215 = vpop.f32.mrf.mxu0
      %v2216 = vadd.f32 %v2170, %v2215
      %2217 = vmatmul.f32.gmra.mxu0 %v2184
      %v2218 = vpop.f32.mrf.mxu0
      %v2219 = vadd.f32 %v2170, %v2218
      %2220 = vmatmul.f32.gmra.mxu0 %v2187
      %v2221 = vpop.f32.mrf.mxu0
      %v2222 = vadd.f32 %v2170, %v2221
      %2223 = vdwg.mxu0
      %v2224 = vmax.f32 %v2207, 0.0
      %v2225 = vmax.f32 %v2210, 0.0
      %v2226 = vmax.f32 %v2213, 0.0
      %v2227 = vmax.f32 %v2216, 0.0
      %v2228 = vmax.f32 %v2219, 0.0
      %v2229 = vmax.f32 %v2222, 0.0
      %v2230 = vld [vmem:[%s6] sm:$0xff]
      %v2231 = vld [vmem:[%s6 + $0x8] sm:$0xff]
      %v2232 = vld [vmem:[%s6 + $0x10] sm:$0xff]
      %v2233 = vld [vmem:[%s6 + $0x18] sm:$0xff]
      %v2234 = vld [vmem:[%s6 + $0x20] sm:$0xff]
      %v2235 = vld [vmem:[%s6 + $0x28] sm:$0xff]
      %v2236 = vld [vmem:[%s6 + $0x30] sm:$0xff]
      %v2237 = vld [vmem:[%s6 + $0x38] sm:$0xff]
      %v2238 = vld [vmem:[%s6 + $0x40] sm:$0x1]
      %v2239 = vperm.slane %v2238, 0
      %vm2240 = vcmask 523264
      %v2242 = vsel %vm2240, %v2224, 0
      %v2245 = vsel %vm2240, %v2225, 0
      %v2248 = vsel %vm2240, %v2226, 0
      %v2251 = vsel %vm2240, %v2227, 0
      %v2254 = vsel %vm2240, %v2228, 0
      %v2257 = vsel %vm2240, %v2229, 0
      %2259 = vmatpush.msra.mxu0 0.0
      %2260 = vmatpush.msra.mxu0 0.0
      %2261 = vmatpush.msra.mxu0 0.0
      %2262 = vmatpush.msra.mxu0 0.0
      %2263 = vmatpush.msra.mxu0 0.0
      %2264 = vmatpush.msra.mxu0 0.0
      %2265 = vmatpush.msra.mxu0 0.0
      %2266 = vmatpush.msra.mxu0 0.0
      %2267 = vmatpush.msra.mxu0 %v2237
      %2268 = vmatpush.msra.mxu0 %v2236
      %2269 = vmatpush.msra.mxu0 %v2235
      %2270 = vmatpush.msra.mxu0 %v2234
      %2271 = vmatpush.msra.mxu0 %v2233
      %2272 = vmatpush.msra.mxu0 %v2232
      %2273 = vmatpush.msra.mxu0 %v2231
      %2274 = vmatpush.msra.mxu0 %v2230
      %2275 = vmatmul.f32.gmra.mxu0 %v2242
      %v2276 = vpop.f32.mrf.mxu0
      %v2277 = vadd.f32 %v2239, %v2276
      %2278 = vmatmul.f32.gmra.mxu0 %v2245
      %v2279 = vpop.f32.mrf.mxu0
      %v2280 = vadd.f32 %v2239, %v2279
      %2281 = vmatmul.f32.gmra.mxu0 %v2248
      %v2282 = vpop.f32.mrf.mxu0
      %v2283 = vadd.f32 %v2239, %v2282
      %2284 = vmatmul.f32.gmra.mxu0 %v2251
      %v2285 = vpop.f32.mrf.mxu0
      %v2286 = vadd.f32 %v2239, %v2285
      %2287 = vmatmul.f32.gmra.mxu0 %v2254
      %v2288 = vpop.f32.mrf.mxu0
      %v2289 = vadd.f32 %v2239, %v2288
      %2290 = vmatmul.f32.gmra.mxu0 %v2257
      %v2291 = vpop.f32.mrf.mxu0
      %v2292 = vadd.f32 %v2239, %v2291
      %2293 = vdwg.mxu0
      %v2294 = vadd.f32 %v2159, %v2277
      %v2295 = vadd.f32 %v2160, %v2280
      %v2296 = vadd.f32 %v2161, %v2283
      %v2297 = vadd.f32 %v2162, %v2286
      %v2298 = vadd.f32 %v2163, %v2289
      %v2299 = vadd.f32 %v2164, %v2292
      %v2300 = vsel %vm318, %v2294, 0.0
      %2301 = vadd.xlane.f32.xlu0 %v2300
      %v2302 = vpop.xlane.xlu0 %2301
      %v2303 = vsel %vm318, %v2295, 0.0
      %2304 = vadd.xlane.f32.xlu0 %v2303
      %v2305 = vpop.xlane.xlu0 %2304
      %v2306 = vsel %vm318, %v2296, 0.0
      %2307 = vadd.xlane.f32.xlu0 %v2306
      %v2308 = vpop.xlane.xlu0 %2307
      %v2309 = vsel %vm318, %v2297, 0.0
      %2310 = vadd.xlane.f32.xlu0 %v2309
      %v2311 = vpop.xlane.xlu0 %2310
      %v2312 = vsel %vm318, %v2298, 0.0
      %2313 = vadd.xlane.f32.xlu0 %v2312
      %v2314 = vpop.xlane.xlu0 %2313
      %v2315 = vsel %vm2026, %v2299, 0.0
      %2316 = vadd.xlane.f32.xlu0 %v2315
      %v2317 = vpop.xlane.xlu0 %2316
      %v2318 = vmul.f32 %v2302, %v2036
      %v2319 = vmul.f32 %v2305, %v2036
      %v2320 = vmul.f32 %v2308, %v2036
      %v2321 = vmul.f32 %v2311, %v2036
      %v2322 = vmul.f32 %v2314, %v2036
      %v2323 = vmul.f32 %v2317, %v2036
      %v2324 = vsub.f32 %v2294, %v2318
      %v2325 = vsub.f32 %v2295, %v2319
      %v2326 = vsub.f32 %v2296, %v2320
      %v2327 = vsub.f32 %v2297, %v2321
      %v2328 = vsub.f32 %v2298, %v2322
      %v2329 = vsub.f32 %v2299, %v2323
      %v2330 = vmul.f32 %v2324, %v2324
      %v2331 = vmul.f32 %v2325, %v2325
      %v2332 = vmul.f32 %v2326, %v2326
      %v2333 = vmul.f32 %v2327, %v2327
      %v2334 = vmul.f32 %v2328, %v2328
      %v2335 = vmul.f32 %v2329, %v2329
      %v2336 = vsel %vm318, %v2330, 0.0
      %2337 = vadd.xlane.f32.xlu0 %v2336
      %v2338 = vpop.xlane.xlu0 %2337
      %v2339 = vsel %vm318, %v2331, 0.0
      %2340 = vadd.xlane.f32.xlu0 %v2339
      %v2341 = vpop.xlane.xlu0 %2340
      %v2342 = vsel %vm318, %v2332, 0.0
      %2343 = vadd.xlane.f32.xlu0 %v2342
      %v2344 = vpop.xlane.xlu0 %2343
      %v2345 = vsel %vm318, %v2333, 0.0
      %2346 = vadd.xlane.f32.xlu0 %v2345
      %v2347 = vpop.xlane.xlu0 %2346
      %v2348 = vsel %vm318, %v2334, 0.0
      %2349 = vadd.xlane.f32.xlu0 %v2348
      %v2350 = vpop.xlane.xlu0 %2349
      %v2351 = vsel %vm2026, %v2335, 0.0
      %2352 = vadd.xlane.f32.xlu0 %v2351
      %v2353 = vpop.xlane.xlu0 %2352
      %v2354 = vmul.f32 %v2338, %v2036
      %v2355 = vmul.f32 %v2341, %v2036
      %v2356 = vmul.f32 %v2344, %v2036
      %v2357 = vmul.f32 %v2347, %v2036
      %v2358 = vmul.f32 %v2350, %v2036
      %v2359 = vmul.f32 %v2353, %v2036
      %v2360 = vadd.f32 %v2354, 1e-05
      %v2361 = vadd.f32 %v2355, 1e-05
      %v2362 = vadd.f32 %v2356, 1e-05
      %v2363 = vadd.f32 %v2357, 1e-05
      %v2364 = vadd.f32 %v2358, 1e-05
      %v2365 = vadd.f32 %v2359, 1e-05
      %v2366 = vrsqrt.pop %v2360
      %v2367 = vmul.f32 %v2366, %v2360
      %v2368 = vmul.f32 %v2367, %v2366
      %v2369 = vmul.f32 0.5, %v2368
      %v2370 = vsub.f32 1.5, %v2369
      %v2371 = vmul.f32 %v2366, %v2370
      %vm2372 = vweird.f32 %v2360
      %vm2373 = vweird.f32 %v2366
      %vm2374 = vmor %vm2372, %vm2373
      %v2375 = vsel %vm2374, %v2366, %v2371
      %v2376 = vrsqrt.pop %v2361
      %v2377 = vmul.f32 %v2376, %v2361
      %v2378 = vmul.f32 %v2377, %v2376
      %v2379 = vmul.f32 0.5, %v2378
      %v2380 = vsub.f32 1.5, %v2379
      %v2381 = vmul.f32 %v2376, %v2380
      %vm2382 = vweird.f32 %v2361
      %vm2383 = vweird.f32 %v2376
      %vm2384 = vmor %vm2382, %vm2383
      %v2385 = vsel %vm2384, %v2376, %v2381
      %v2386 = vrsqrt.pop %v2362
      %v2387 = vmul.f32 %v2386, %v2362
      %v2388 = vmul.f32 %v2387, %v2386
      %v2389 = vmul.f32 0.5, %v2388
      %v2390 = vsub.f32 1.5, %v2389
      %v2391 = vmul.f32 %v2386, %v2390
      %vm2392 = vweird.f32 %v2362
      %vm2393 = vweird.f32 %v2386
      %vm2394 = vmor %vm2392, %vm2393
      %v2395 = vsel %vm2394, %v2386, %v2391
      %v2396 = vrsqrt.pop %v2363
      %v2397 = vmul.f32 %v2396, %v2363
      %v2398 = vmul.f32 %v2397, %v2396
      %v2399 = vmul.f32 0.5, %v2398
      %v2400 = vsub.f32 1.5, %v2399
      %v2401 = vmul.f32 %v2396, %v2400
      %vm2402 = vweird.f32 %v2363
      %vm2403 = vweird.f32 %v2396
      %vm2404 = vmor %vm2402, %vm2403
      %v2405 = vsel %vm2404, %v2396, %v2401
      %v2406 = vrsqrt.pop %v2364
      %v2407 = vmul.f32 %v2406, %v2364
      %v2408 = vmul.f32 %v2407, %v2406
      %v2409 = vmul.f32 0.5, %v2408
      %v2410 = vsub.f32 1.5, %v2409
      %v2411 = vmul.f32 %v2406, %v2410
      %vm2412 = vweird.f32 %v2364
      %vm2413 = vweird.f32 %v2406
      %vm2414 = vmor %vm2412, %vm2413
      %v2415 = vsel %vm2414, %v2406, %v2411
      %v2416 = vrsqrt.pop %v2365
      %v2417 = vmul.f32 %v2416, %v2365
      %v2418 = vmul.f32 %v2417, %v2416
      %v2419 = vmul.f32 0.5, %v2418
      %v2420 = vsub.f32 1.5, %v2419
      %v2421 = vmul.f32 %v2416, %v2420
      %vm2422 = vweird.f32 %v2365
      %vm2423 = vweird.f32 %v2416
      %vm2424 = vmor %vm2422, %vm2423
      %v2425 = vsel %vm2424, %v2416, %v2421
      %v2426 = vmul.f32 %v2324, %v2375
      %v2427 = vmul.f32 %v2325, %v2385
      %v2428 = vmul.f32 %v2326, %v2395
      %v2429 = vmul.f32 %v2327, %v2405
      %v2430 = vmul.f32 %v2328, %v2415
      %v2431 = vmul.f32 %v2329, %v2425
      %v2432 = vperm.slane %v2004, 2
      %v2433 = vmul.f32 %v2426, %v2432
      %v2434 = vmul.f32 %v2427, %v2432
      %v2435 = vmul.f32 %v2428, %v2432
      %v2436 = vmul.f32 %v2429, %v2432
      %v2437 = vmul.f32 %v2430, %v2432
      %v2438 = vmul.f32 %v2431, %v2432
      %v2439 = vperm.slane %v2004, 3
      %v2440 = vadd.f32 %v2433, %v2439
      %v2441 = vadd.f32 %v2434, %v2439
      %v2442 = vadd.f32 %v2435, %v2439
      %v2443 = vadd.f32 %v2436, %v2439
      %v2444 = vadd.f32 %v2437, %v2439
      %v2445 = vadd.f32 %v2438, %v2439
      %2446 = vst.msk [vmem:[%s305] sm:$0xff] %vm318, %v2440
      %2447 = vst.msk [vmem:[%s305 + $0x8] sm:$0xff] %vm318, %v2441
      %2448 = vst.msk [vmem:[%s305 + $0x10] sm:$0xff] %vm318, %v2442
      %2449 = vst.msk [vmem:[%s305 + $0x18] sm:$0xff] %vm318, %v2443
      %2450 = vst.msk [vmem:[%s305 + $0x20] sm:$0xff] %vm318, %v2444
      %2451 = vst.msk [vmem:[%s305 + $0x28] sm:$0x1f] %vm2026, %v2445
      %p2452 = scmp.lt.s32.totalorder %s19, 1
      %s2453 = scalar_select %p2452, %s19, 1
      %s2454 = smul.addr %s2453, 6
      %s2455 = smul.addr %s2454, 8
      %s2456 = scalar_lea.vmem %s8, %s2455
      // Predicated region
      $region53: #{tpu_custom_call.1} parent=51 // pred_check
        %p2457 = pneg %p210
      $region54: #{tpu_custom_call.1} parent=51 // pred_check_branch
        %2459 = sbr.rel (%p2457) target = $region56
      $region55: #{tpu_custom_call.1} parent=51 // pred_region
        _
      $region56: #{tpu_custom_call.1} parent=51 // pred_fallthru
        _
    $region52: #{tpu_custom_call.1} parent=5 // pred_fallthru
      _
    %p2460 = scmp.le.s32.totalorder 2, %s14
    // Predicated region
    $region57: #{tpu_custom_call.1} parent=5 // pred_check
      %p2461 = pneg %p2460
    $region58: #{tpu_custom_call.1} parent=5 // pred_check_branch
      %2463 = sbr.rel (%p2461) target = $region60
    $region59: #{tpu_custom_call.1} parent=5 // pred_region
      %s2464 = ssub.s32 %s14, 2
      // Predicated region
      $region61: #{tpu_custom_call.1} parent=59 // pred_check
        %p2465 = pneg %p216
      $region62: #{tpu_custom_call.1} parent=59 // pred_check_branch
        %2467 = sbr.rel (%p2465) target = $region64
      $region63: #{tpu_custom_call.1} parent=59 // pred_region
        %p2468 = scmp.lt.s32.totalorder %s20, 1
        %s2469 = scalar_select %p2468, %s20, 1
        %s2470 = smul.addr %s2469, 6
        %s2471 = smul.addr %s2470, 8
        %s2472 = scalar_lea.vmem %s8, %s2471
      $region64: #{tpu_custom_call.1} parent=59 // pred_fallthru
        _
    $region60: #{tpu_custom_call.1} parent=5 // pred_fallthru
      _
  $region6: #{tpu_custom_call.1} parent=0 // loop_footer
    %s18 = sadd.s32 1, %s14
  $region7: #{tpu_custom_call.1} parent=0 // loop_footer_branch
    %13 = sbr.rel target = $region3
  $region8: #{tpu_custom_call.1} parent=0 // loop_exit
    _

</llo_original>
